<compile_context>
chip_gen: v5e
topology: v5e:2x2
jax: 0.10.0
libtpu: 0.0.40
codegen_flags: <defaults>
</compile_context>

<pallas_src>
import functools
import math

import jax
import jax.numpy as jnp
import numpy as np
from jax import lax
from jax.experimental import pallas as pl
from jax.experimental.pallas import tpu as pltpu

_MIB = 1024 * 1024


# ---------------------------------------------------------------------------
# Positional encoding (deterministic glue, computed once in plain JAX)
# ---------------------------------------------------------------------------
def positional_encoding_2d(c, h, w, dtype=jnp.float32):
    """Replicates PositionalEncoding2D: returns (h, w, c)."""
    channels = int(math.ceil(c / 2))
    inv_freq = 1.0 / (10000 ** (jnp.arange(0, channels, 2, dtype=jnp.float32) / channels))
    pos_x = jnp.arange(h, dtype=jnp.float32)
    pos_y = jnp.arange(w, dtype=jnp.float32)
    sin_inp_x = jnp.einsum("i,j->ij", pos_x, inv_freq)          # (h, L)
    sin_inp_y = jnp.einsum("i,j->ij", pos_y, inv_freq)          # (w, L)
    emb_x = jnp.concatenate([jnp.sin(sin_inp_x), jnp.cos(sin_inp_x)], axis=-1)[:, None, :]
    emb_y = jnp.concatenate([jnp.sin(sin_inp_y), jnp.cos(sin_inp_y)], axis=-1)
    emb = jnp.zeros((h, w, channels * 2), dtype=dtype)
    emb = emb.at[:, :, :channels].set(
        jnp.broadcast_to(emb_x, (h, w, emb_x.shape[-1])).astype(dtype))
    emb = emb.at[:, :, channels:2 * channels].set(
        jnp.broadcast_to(emb_y[None], (h, w, emb_y.shape[-1])).astype(dtype))
    return emb[:, :, :c]                                        # (h, w, c)


# ---------------------------------------------------------------------------
# Pallas kernel: grid = (key_splits, batch, key_tiles_per_split)
# ---------------------------------------------------------------------------
def _mhsa_kernel(x_ref, pe_ref, wq_ref, wkv_ref, o_ref, q_ref, *, cp, tk):
    # x_ref  : (1, cp, hw)    batch element, channels-first (cp = padded channels)
    # pe_ref : (cp, hw)       positional encoding, channels-first
    # wq_ref : (cp, cp)       Wq^T / sqrt(c), zero-padded
    # wkv_ref: (2*cp, cp)     [Wk^T ; Wv^T], zero-padded
    # o_ref  : (1, 1, cp, hw) output slab for this (split, batch); resident
    #                         across key tiles and used directly as accumulator
    # q_ref  : (cp, hw)       VMEM scratch: Q^T stash (per (split, batch))
    s = pl.program_id(0)            # key-split index (v7x two-core work split)
    kt = pl.program_id(2)           # key-tile index within this split
    n_kt = pl.num_programs(2)
    hw = x_ref.shape[2]

    # x + PE for this key tile, sliced from the resident full block (single
    # HBM stream).  tk is a multiple of 128, so the dynamic lane slice stays
    # tile-aligned.
    if tk == hw:                    # static: single key tile == whole block
        xk = x_ref[0].astype(jnp.float32) + pe_ref[...]                   # (cp, hw)
    else:
        kstart = pl.multiple_of((s * n_kt + kt) * tk, tk)
        xk = (x_ref[0, :, pl.ds(kstart, tk)].astype(jnp.float32)
              + pe_ref[:, pl.ds(kstart, tk)])                             # (cp, tk)

    @pl.when(kt == 0)
    def _():
        # Once per (split, batch): Q projection over all hw queries (stashed in
        # VMEM scratch) and zero-init of the resident output accumulator.
        if tk == hw:                # static: reuse the already-added tile
            xq = xk
        else:
            xq = x_ref[0].astype(jnp.float32) + pe_ref[...]               # (cp, hw)
        q_ref[...] = jnp.dot(wq_ref[...], xq,
                             preferred_element_type=jnp.float32)          # (cp, hw)
        o_ref[0, 0] = jnp.zeros((cp, hw), jnp.float32)

    # Fused K/V projection for this key tile: one (2cp, cp) @ (cp, tk) matmul.
    kv = jnp.dot(wkv_ref[...], xk, preferred_element_type=jnp.float32)    # (2cp, tk)
    k_t = kv[0:cp, :]                                                     # (cp, tk)
    v_t = kv[cp:2 * cp, :]                                                # (cp, tk)

    # Transposed scores: s_t[j, i] = sum_ch K[j,ch] Q[i,ch]; 1/sqrt(c) is
    # already folded into Wq.  The contracted operand k_t is only (cp, tk),
    # so any operand re-layout Mosaic needs here is small.
    s_t = lax.dot_general(k_t, q_ref[...], (((0,), (0,)), ((), ())),
                          preferred_element_type=jnp.float32)             # (tk, hw)

    # PyTorch nn.Softmax(dim=1) normalizes over the *query* axis — the lane
    # axis here — so each key row is independent and the per-tile softmax is
    # exact (no online stats).  max/sum are XLU lane reduces; the reciprocal
    # stays on the EUP (approx + one Newton step).
    s_max = jnp.max(s_t, axis=-1, keepdims=True)                          # (tk, 1)
    e_t = jnp.exp(s_t - s_max)                                            # (tk, hw)
    denom = jnp.sum(e_t, axis=-1, keepdims=True)                          # (tk, 1)
    inv = pl.reciprocal(denom, approx=True)
    inv = inv * (2.0 - denom * inv)                                       # one Newton step
    p = e_t * inv                                                         # (tk, hw)

    # out^T[ch, i] += sum_j V^T[ch, j] p[j, i] — accumulate straight into the
    # resident output block (no acc scratch, no epilogue copy).
    o_ref[0, 0] += lax.dot_general(v_t, p, (((1,), (0,)), ((), ())),
                                   preferred_element_type=jnp.float32)


# ---------------------------------------------------------------------------
# VMEM budgeting / tile selection (generation-aware)
# ---------------------------------------------------------------------------
def _vmem_capacity_bytes():
    try:
        return int(pltpu.get_tpu_info().vmem_capacity_bytes)
    except Exception:               # conservative fallback: v7x per-TC VMEM
        return 64 * _MIB


def _vmem_estimate_bytes(cp, hw, tk, x_buffers):
    """Rough per-grid-step VMEM footprint (f32 everywhere)."""
    f32 = 4
    blocks = (x_buffers * cp * hw       # x input block(s)
              + cp * hw                 # positional encoding (grid-constant, 1 buffer)
              + 3 * cp * cp             # Wq + fused [Wk;Wv]   (grid-constant, 1 buffer)
              + 2 * cp * hw)            # resident output accumulator (double-buffered)
    scratch = cp * hw                   # Q^T stash
    temps = 3 * tk * hw + cp * hw + 2 * cp * tk + 16 * tk   # s_t/e_t/p + matmul temps
    return f32 * (blocks + scratch + temps)


def _pick_key_tile(cp, hw, budget_bytes, x_buffers):
    if _vmem_estimate_bytes(cp, hw, hw, x_buffers) <= budget_bytes:
        return hw                       # whole key axis in one pass
    for t in (4096, 2048, 1024, 512, 256, 128):
        if t < hw and hw % t == 0 and \
                _vmem_estimate_bytes(cp, hw, t, x_buffers) <= budget_bytes:
            return t
    # TODO(synk): query-axis tiling (online softmax over the query axis) for hw
    # so large that even tk=128 does not fit the VMEM budget.
    raise ValueError(
        f"MultiHeadSelfAttention Pallas kernel: hw={hw}, padded c={cp} does not "
        f"fit the {budget_bytes >> 20} MiB VMEM budget at any lane-aligned key "
        f"tile; query-axis tiling is required.")


# ---------------------------------------------------------------------------
# Wrapper
# ---------------------------------------------------------------------------
def mhsa_forward(x_nchw, wq, wk, wv, *, key_tile=None, key_splits=None):
    n, c, h, w = x_nchw.shape
    hw = h * w
    scale = 1.0 / math.sqrt(c)
    cp = max(8, -(-c // 8) * 8)          # channels padded to a sublane multiple

    # Generation-aware VMEM policy: use what the part actually has (128 MiB on
    # v5e/v6e, 64 MiB per TensorCore on v7x) minus headroom for Mosaic-internal
    # scratch and temporaries the estimate cannot see.
    cap = _vmem_capacity_bytes()
    usable = cap - max(8 * _MIB, cap // 8)        # 128 MiB -> 112, 64 MiB -> 56
    small_vmem = cap <= 96 * _MIB                 # v7x-class part
    x_buffers = 1 if small_vmem else 2            # single-buffer x only where VMEM is tight

    tk = key_tile if key_tile is not None else _pick_key_tile(cp, hw, usable, x_buffers)
    if hw % tk != 0:
        raise ValueError(f"key_tile={tk} must divide h*w={hw}")
    nkt = hw // tk

    # v7x has two TensorCores: with a single batch element, split the key axis
    # across a leading "parallel" grid axis so both cores have work; the
    # partial (c, hw) slabs are summed by a trivial XLA add below.
    if key_splits is not None:
        n_split = key_splits
    elif n == 1 and small_vmem and nkt >= 2 and nkt % 2 == 0:
        n_split = 2
    else:
        n_split = 1
    if nkt % n_split != 0:
        raise ValueError(f"key_splits={n_split} must divide the {nkt} key tiles")
    nkt_split = nkt // n_split

    # Positional encoding in channels-first (c, hw); tiny one-time constant.
    pe = positional_encoding_2d(c, h, w, dtype=jnp.float32)               # (h, w, c)
    pe_chw = jnp.transpose(pe, (2, 0, 1)).reshape(c, hw)                  # (c, hw)

    # Channels-first sequence layout: metadata-only reshape, no HBM transpose.
    x_cs = x_nchw.reshape(n, c, hw)
    if cp != c:                          # sublane-pad channels once (no-op if c % 8 == 0)
        x_cs = jnp.pad(x_cs, ((0, 0), (0, cp - c), (0, 0)))
        pe_chw = jnp.pad(pe_chw, ((0, cp - c), (0, 0)))

    # Pre-transposed weights, 1/sqrt(c) folded into Wq, zero-padded to (cp, cp);
    # K and V fused into a single projection matrix.
    def _prep(wm, sc=1.0):
        return jnp.pad(wm.T.astype(jnp.float32) * sc, ((0, cp - c), (0, cp - c)))
    wq_t = _prep(wq, scale)                                               # (cp, cp)
    wkv_t = jnp.concatenate([_prep(wk), _prep(wv)], axis=0)               # (2cp, cp)

    kernel = functools.partial(_mhsa_kernel, cp=cp, tk=tk)
    grid = (n_split, n, nkt_split)
    out_shape = jax.ShapeDtypeStruct((n_split, n, cp, hw), jnp.float32)

    def _specs(use_pipeline_mode):
        def bspec(shape, index_map, buffers):
            if use_pipeline_mode and buffers is not None and hasattr(pl, "Buffered"):
                try:
                    return pl.BlockSpec(shape, index_map,
                                        pipeline_mode=pl.Buffered(buffers))
                except TypeError:
                    pass
            return pl.BlockSpec(shape, index_map)
        in_specs = [
            bspec((1, cp, hw), lambda s, b, k: (b, 0, 0),
                  1 if small_vmem else None),                  # x (channels-first)
            bspec((cp, hw), lambda s, b, k: (0, 0), 1),        # positional encoding
            bspec((cp, cp), lambda s, b, k: (0, 0), 1),        # Wq^T (scaled, padded)
            bspec((2 * cp, cp), lambda s, b, k: (0, 0), 1),    # [Wk^T ; Wv^T] fused
        ]
        out_specs = pl.BlockSpec((1, 1, cp, hw), lambda s, b, k: (s, b, 0, 0))
        return in_specs, out_specs

    def _run(use_pipeline_mode):
        in_specs, out_specs = _specs(use_pipeline_mode)
        return pl.pallas_call(
            kernel,
            out_shape=out_shape,
            grid_spec=pltpu.PrefetchScalarGridSpec(
                num_scalar_prefetch=0,
                grid=grid,
                in_specs=in_specs,
                out_specs=out_specs,
                scratch_shapes=[pltpu.VMEM((cp, hw), jnp.float32)],   # Q^T stash
            ),
            compiler_params=pltpu.CompilerParams(
                dimension_semantics=("parallel", "parallel", "arbitrary"),
                vmem_limit_bytes=int(usable),
            ),
        )(x_cs, pe_chw, wq_t, wkv_t)

    try:
        out_parts = _run(True)
    except Exception:
        # Fallback for toolchains without single-buffer pipeline_mode support.
        out_parts = _run(False)

    out_cs = out_parts[0] if n_split == 1 else jnp.sum(out_parts, axis=0)  # (n, cp, hw)
    if cp != c:
        out_cs = out_cs[:, :c, :]
    return out_cs.astype(x_nchw.dtype).reshape(n, c, h, w)


# ---------------------------------------------------------------------------
# Pure-JAX reference (mirrors the PyTorch forward exactly)
# ---------------------------------------------------------------------------
def mhsa_reference(x_nchw, wq, wk, wv):
    n, c, h, w = x_nchw.shape
    hw = h * w
    pe = positional_encoding_2d(c, h, w, dtype=x_nchw.dtype)              # (h, w, c)
    pe_nchw = jnp.transpose(pe, (2, 0, 1))[None]                          # (1, c, h, w)
    x = x_nchw + pe_nchw
    x = jnp.transpose(x.reshape(n, c, hw), (0, 2, 1))                     # (n, hw, c)
    q = jnp.einsum("bsc,cd->bsd", x, wq)
    k = jnp.einsum("bsc,cd->bsd", x, wk)
    v = jnp.einsum("bsc,cd->bsd", x, wv)
    s = jnp.einsum("bic,bjc->bij", q, k) / math.sqrt(c)
    a = jax.nn.softmax(s, axis=1)                                         # dim=1 !
    out = jnp.einsum("bij,bjc->bic", a, v)
    return jnp.transpose(out, (0, 2, 1)).reshape(n, c, h, w)


# ---------------------------------------------------------------------------
# Deterministic parameter init (kaiming_uniform_ with a=sqrt(5) on (d, d))
# ---------------------------------------------------------------------------
def kaiming_uniform(key, d):
    gain = math.sqrt(2.0 / (1.0 + 5.0))       # a = sqrt(5)
    bound = gain * math.sqrt(3.0 / d)         # fan_in = d
    return jax.random.uniform(key, (d, d), jnp.float32, minval=-bound, maxval=bound)


if __name__ == "__main__":
    key = jax.random.PRNGKey(0)
    kx, kq, kk, kv_key, kx2 = jax.random.split(key, 5)

    # Case 1: default tiling (single key tile), c not a multiple of 8.
    n, c, h, w = 2, 4, 16, 16
    x = jax.random.normal(kx, (n, c, h, w), jnp.float32)
    wq = kaiming_uniform(kq, c)
    wk = kaiming_uniform(kk, c)
    wv = kaiming_uniform(kv_key, c)
    out = jax.block_until_ready(mhsa_forward(x, wq, wk, wv))
    ref = jax.block_until_ready(mhsa_reference(x, wq, wk, wv))
    np.testing.assert_allclose(np.asarray(out), np.asarray(ref), rtol=2e-4, atol=2e-5)

    # Case 2: exercise the multi-key-tile accumulation path, the in-kernel
    # lane-aligned key slice, and the 2-way key split (v7x two-core path).
    n2, c2, h2, w2 = 1, 8, 16, 32
    x2 = jax.random.normal(kx2, (n2, c2, h2, w2), jnp.float32)
    wq2 = kaiming_uniform(jax.random.fold_in(kq, 1), c2)
    wk2 = kaiming_uniform(jax.random.fold_in(kk, 1), c2)
    wv2 = kaiming_uniform(jax.random.fold_in(kv_key, 1), c2)
    out2 = jax.block_until_ready(
        mhsa_forward(x2, wq2, wk2, wv2, key_tile=128, key_splits=2))
    ref2 = jax.block_until_ready(mhsa_reference(x2, wq2, wk2, wv2))
    np.testing.assert_allclose(np.asarray(out2), np.asarray(ref2), rtol=2e-4, atol=2e-5)

    print("KERNEL_OK")
</pallas_src>

<mosaic_0001>
module attributes {stable_mosaic.version = 11 : i64} {
  func.func @_mhsa_kernel(%arg0: i32, %arg1: i32, %arg2: i32, %arg3: memref<1x8x256xf32, #tpu.memory_space<vmem>>, %arg4: memref<8x256xf32, #tpu.memory_space<vmem>>, %arg5: memref<8x8xf32, #tpu.memory_space<vmem>>, %arg6: memref<16x8xf32, #tpu.memory_space<vmem>>, %arg7: memref<1x1x8x256xf32, #tpu.memory_space<vmem>>, %arg8: memref<8x256xf32, #tpu.memory_space<vmem>>) attributes {dimension_semantics = [#tpu.dimension_semantics<parallel>, #tpu.dimension_semantics<parallel>, #tpu.dimension_semantics<arbitrary>], iteration_bounds = array<i64: 1, 2, 1>, scalar_prefetch = 0 : i64, scratch_operands = 1 : i64, tpu.core_type = #tpu.core_type<tc>, window_params = [{pipeline_mode = #tpu.pipeline_mode<synchronous>, transform_indices = @transform_0, window_bounds = array<i64: 1, 8, 256>}, {pipeline_mode = #tpu.pipeline_mode<synchronous>, transform_indices = @transform_1, window_bounds = array<i64: 8, 256>}, {pipeline_mode = #tpu.pipeline_mode<synchronous>, transform_indices = @transform_2, window_bounds = array<i64: 8, 8>}, {pipeline_mode = #tpu.pipeline_mode<synchronous>, transform_indices = @transform_3, window_bounds = array<i64: 16, 8>}, {transform_indices = @transform_4, window_bounds = array<i64: 1, 1, 8, 256>}]} {
    %c0 = arith.constant 0 : index
    %c0_0 = arith.constant 0 : index
    %c0_1 = arith.constant 0 : index
    %0 = vector.load %arg3[%c0, %c0_0, %c0_1] : memref<1x8x256xf32, #tpu.memory_space<vmem>>, vector<1x8x256xf32>
    %1 = vector.shape_cast %0 : vector<1x8x256xf32> to vector<8x256xf32>
    %c0_2 = arith.constant 0 : index
    %c0_3 = arith.constant 0 : index
    %2 = vector.load %arg4[%c0_2, %c0_3] : memref<8x256xf32, #tpu.memory_space<vmem>>, vector<8x256xf32>
    %3 = arith.addf %1, %2 : vector<8x256xf32>
    %c0_i32 = arith.constant 0 : i32
    %4 = arith.cmpi eq, %arg2, %c0_i32 : i32
    %5 = arith.extui %4 : i1 to i32
    %c0_i32_4 = arith.constant 0 : i32
    %6 = arith.cmpi ne, %5, %c0_i32_4 : i32
    scf.if %6 {
      %c0_22 = arith.constant 0 : index
      %c0_23 = arith.constant 0 : index
      %34 = vector.load %arg5[%c0_22, %c0_23] : memref<8x8xf32, #tpu.memory_space<vmem>>, vector<8x8xf32>
      %cst_24 = arith.constant dense<0.000000e+00> : vector<8x256xf32>
      %35 = tpu.matmul %34, %3, %cst_24 {dimension_numbers = #tpu.dot_dimension_numbers<[1], [0], [0], [1], [0, 0, 1, 1], [], []>} : vector<8x8xf32>, vector<8x256xf32>, vector<8x256xf32> -> vector<8x256xf32>
      %c0_25 = arith.constant 0 : index
      %c0_26 = arith.constant 0 : index
      %36 = vector.load %arg8[%c0_25, %c0_26] : memref<8x256xf32, #tpu.memory_space<vmem>>, vector<8x256xf32>
      tpu.vector_store %arg8[%c0_25, %c0_26], %35 {strides = array<i32>} : memref<8x256xf32, #tpu.memory_space<vmem>>, vector<8x256xf32>,
      %cst_27 = arith.constant 0.000000e+00 : f32
      %37 = vector.broadcast %cst_27 : f32 to vector<8x256xf32>
      %c0_28 = arith.constant 0 : index
      %c0_29 = arith.constant 0 : index
      %c0_30 = arith.constant 0 : index
      %c0_31 = arith.constant 0 : index
      %38 = vector.load %arg7[%c0_28, %c0_29, %c0_30, %c0_31] : memref<1x1x8x256xf32, #tpu.memory_space<vmem>>, vector<1x1x8x256xf32>
      %39 = vector.shape_cast %38 : vector<1x1x8x256xf32> to vector<8x256xf32>
      %40 = vector.shape_cast %37 : vector<8x256xf32> to vector<1x1x8x256xf32>
      tpu.vector_store %arg7[%c0_28, %c0_29, %c0_30, %c0_31], %40 {strides = array<i32>} : memref<1x1x8x256xf32, #tpu.memory_space<vmem>>, vector<1x1x8x256xf32>,
    } else {
    }
    %c0_5 = arith.constant 0 : index
    %c0_6 = arith.constant 0 : index
    %7 = vector.load %arg6[%c0_5, %c0_6] : memref<16x8xf32, #tpu.memory_space<vmem>>, vector<16x8xf32>
    %cst = arith.constant dense<0.000000e+00> : vector<16x256xf32>
    %8 = tpu.matmul %7, %3, %cst {dimension_numbers = #tpu.dot_dimension_numbers<[1], [0], [0], [1], [0, 0, 1, 1], [], []>} : vector<16x8xf32>, vector<8x256xf32>, vector<16x256xf32> -> vector<16x256xf32>
    %9 = vector.extract_strided_slice %8 {offsets = [0, 0], sizes = [8, 256], strides = [1, 1]} : vector<16x256xf32> to vector<8x256xf32>
    %10 = vector.extract_strided_slice %8 {offsets = [8, 0], sizes = [8, 256], strides = [1, 1]} : vector<16x256xf32> to vector<8x256xf32>
    %c0_7 = arith.constant 0 : index
    %c0_8 = arith.constant 0 : index
    %11 = vector.load %arg8[%c0_7, %c0_8] : memref<8x256xf32, #tpu.memory_space<vmem>>, vector<8x256xf32>
    %cst_9 = arith.constant dense<0.000000e+00> : vector<256x256xf32>
    %12 = tpu.matmul %9, %11, %cst_9 {dimension_numbers = #tpu.dot_dimension_numbers<[0], [0], [1], [1], [0, 1, 1, 1], [], []>} : vector<8x256xf32>, vector<8x256xf32>, vector<256x256xf32> -> vector<256x256xf32>
    %cst_10 = arith.constant dense<0xFF800000> : vector<256xf32>
    %13 = vector.multi_reduction <maximumf>, %12, %cst_10 [1] : vector<256x256xf32> to vector<256xf32>
    %14 = vector.shape_cast %13 : vector<256xf32> to vector<256x1xf32>
    %15 = vector.broadcast %14 : vector<256x1xf32> to vector<256x256xf32>
    %16 = arith.subf %12, %15 : vector<256x256xf32>
    %17 = math.exp %16 : vector<256x256xf32>
    %cst_11 = arith.constant dense<0.000000e+00> : vector<256xf32>
    %18 = vector.multi_reduction <add>, %17, %cst_11 [1] : vector<256x256xf32> to vector<256xf32>
    %19 = vector.shape_cast %18 : vector<256xf32> to vector<256x1xf32>
    %20 = tpu.reciprocal %19 {approx = true} : vector<256x1xf32> -> vector<256x1xf32>
    %21 = arith.mulf %19, %20 : vector<256x1xf32>
    %cst_12 = arith.constant 2.000000e+00 : f32
    %22 = vector.broadcast %cst_12 : f32 to vector<256x1xf32>
    %23 = arith.subf %22, %21 : vector<256x1xf32>
    %24 = arith.mulf %20, %23 : vector<256x1xf32>
    %25 = vector.broadcast %24 : vector<256x1xf32> to vector<256x256xf32>
    %26 = arith.mulf %17, %25 : vector<256x256xf32>
    %c0_13 = arith.constant 0 : index
    %c0_14 = arith.constant 0 : index
    %c0_15 = arith.constant 0 : index
    %c0_16 = arith.constant 0 : index
    %27 = vector.load %arg7[%c0_13, %c0_14, %c0_15, %c0_16] : memref<1x1x8x256xf32, #tpu.memory_space<vmem>>, vector<1x1x8x256xf32>
    %28 = vector.shape_cast %27 : vector<1x1x8x256xf32> to vector<8x256xf32>
    %cst_17 = arith.constant dense<0.000000e+00> : vector<8x256xf32>
    %29 = tpu.matmul %10, %26, %cst_17 {dimension_numbers = #tpu.dot_dimension_numbers<[1], [0], [0], [1], [0, 0, 1, 1], [], []>} : vector<8x256xf32>, vector<256x256xf32>, vector<8x256xf32> -> vector<8x256xf32>
    %30 = arith.addf %28, %29 : vector<8x256xf32>
    %c0_18 = arith.constant 0 : index
    %c0_19 = arith.constant 0 : index
    %c0_20 = arith.constant 0 : index
    %c0_21 = arith.constant 0 : index
    %31 = vector.load %arg7[%c0_18, %c0_19, %c0_20, %c0_21] : memref<1x1x8x256xf32, #tpu.memory_space<vmem>>, vector<1x1x8x256xf32>
    %32 = vector.shape_cast %31 : vector<1x1x8x256xf32> to vector<8x256xf32>
    %33 = vector.shape_cast %30 : vector<8x256xf32> to vector<1x1x8x256xf32>
    tpu.vector_store %arg7[%c0_18, %c0_19, %c0_20, %c0_21], %33 {strides = array<i32>} : memref<1x1x8x256xf32, #tpu.memory_space<vmem>>, vector<1x1x8x256xf32>,
    return
  }
  func.func @transform_0(%arg0: i32, %arg1: i32, %arg2: i32) -> (i32, i32, i32) {
    %c0_i32 = arith.constant 0 : i32
    %c0_i32_0 = arith.constant 0 : i32
    %c0_i32_1 = arith.constant 0 : i32
    return %arg1, %c0_i32, %c0_i32_0 : i32, i32, i32
  }
  func.func @transform_1(%arg0: i32, %arg1: i32, %arg2: i32) -> (i32, i32) {
    %c0_i32 = arith.constant 0 : i32
    %c0_i32_0 = arith.constant 0 : i32
    %c0_i32_1 = arith.constant 0 : i32
    return %c0_i32, %c0_i32_0 : i32, i32
  }
  func.func @transform_2(%arg0: i32, %arg1: i32, %arg2: i32) -> (i32, i32) {
    %c0_i32 = arith.constant 0 : i32
    %c0_i32_0 = arith.constant 0 : i32
    %c0_i32_1 = arith.constant 0 : i32
    return %c0_i32, %c0_i32_0 : i32, i32
  }
  func.func @transform_3(%arg0: i32, %arg1: i32, %arg2: i32) -> (i32, i32) {
    %c0_i32 = arith.constant 0 : i32
    %c0_i32_0 = arith.constant 0 : i32
    %c0_i32_1 = arith.constant 0 : i32
    return %c0_i32, %c0_i32_0 : i32, i32
  }
  func.func @transform_4(%arg0: i32, %arg1: i32, %arg2: i32) -> (i32, i32, i32, i32) {
    %c0_i32 = arith.constant 0 : i32
    %c0_i32_0 = arith.constant 0 : i32
    %c0_i32_1 = arith.constant 0 : i32
    return %arg0, %arg1, %c0_i32, %c0_i32_0 : i32, i32, i32, i32
  }
}

module attributes {stable_mosaic.version = 11 : i64} {
  func.func @_mhsa_kernel(%arg0: i32, %arg1: i32, %arg2: i32, %arg3: memref<1x8x256xf32, #tpu.memory_space<vmem>>, %arg4: memref<8x256xf32, #tpu.memory_space<vmem>>, %arg5: memref<8x8xf32, #tpu.memory_space<vmem>>, %arg6: memref<16x8xf32, #tpu.memory_space<vmem>>, %arg7: memref<1x1x8x256xf32, #tpu.memory_space<vmem>>, %arg8: memref<8x256xf32, #tpu.memory_space<vmem>>) attributes {dimension_semantics = [#tpu.dimension_semantics<parallel>, #tpu.dimension_semantics<parallel>, #tpu.dimension_semantics<arbitrary>], iteration_bounds = array<i64: 1, 2, 1>, scalar_prefetch = 0 : i64, scratch_operands = 1 : i64, tpu.core_type = #tpu.core_type<tc>, window_params = [{transform_indices = @transform_0, window_bounds = array<i64: 1, 8, 256>}, {pipeline_mode = #tpu.pipeline_mode<synchronous>, transform_indices = @transform_1, window_bounds = array<i64: 8, 256>}, {pipeline_mode = #tpu.pipeline_mode<synchronous>, transform_indices = @transform_2, window_bounds = array<i64: 8, 8>}, {pipeline_mode = #tpu.pipeline_mode<synchronous>, transform_indices = @transform_3, window_bounds = array<i64: 16, 8>}, {transform_indices = @transform_4, window_bounds = array<i64: 1, 1, 8, 256>}]} {
    %c0 = arith.constant 0 : index
    %c0_0 = arith.constant 0 : index
    %c0_1 = arith.constant 0 : index
    %0 = vector.load %arg3[%c0, %c0_0, %c0_1] : memref<1x8x256xf32, #tpu.memory_space<vmem>>, vector<1x8x256xf32>
    %1 = vector.shape_cast %0 : vector<1x8x256xf32> to vector<8x256xf32>
    %c0_2 = arith.constant 0 : index
    %c0_3 = arith.constant 0 : index
    %2 = vector.load %arg4[%c0_2, %c0_3] : memref<8x256xf32, #tpu.memory_space<vmem>>, vector<8x256xf32>
    %3 = arith.addf %1, %2 : vector<8x256xf32>
    %c0_i32 = arith.constant 0 : i32
    %4 = arith.cmpi eq, %arg2, %c0_i32 : i32
    %5 = arith.extui %4 : i1 to i32
    %c0_i32_4 = arith.constant 0 : i32
    %6 = arith.cmpi ne, %5, %c0_i32_4 : i32
    scf.if %6 {
      %c0_22 = arith.constant 0 : index
      %c0_23 = arith.constant 0 : index
      %34 = vector.load %arg5[%c0_22, %c0_23] : memref<8x8xf32, #tpu.memory_space<vmem>>, vector<8x8xf32>
      %cst_24 = arith.constant dense<0.000000e+00> : vector<8x256xf32>
      %35 = tpu.matmul %34, %3, %cst_24 {dimension_numbers = #tpu.dot_dimension_numbers<[1], [0], [0], [1], [0, 0, 1, 1], [], []>} : vector<8x8xf32>, vector<8x256xf32>, vector<8x256xf32> -> vector<8x256xf32>
      %c0_25 = arith.constant 0 : index
      %c0_26 = arith.constant 0 : index
      %36 = vector.load %arg8[%c0_25, %c0_26] : memref<8x256xf32, #tpu.memory_space<vmem>>, vector<8x256xf32>
      tpu.vector_store %arg8[%c0_25, %c0_26], %35 {strides = array<i32>} : memref<8x256xf32, #tpu.memory_space<vmem>>, vector<8x256xf32>,
      %cst_27 = arith.constant 0.000000e+00 : f32
      %37 = vector.broadcast %cst_27 : f32 to vector<8x256xf32>
      %c0_28 = arith.constant 0 : index
      %c0_29 = arith.constant 0 : index
      %c0_30 = arith.constant 0 : index
      %c0_31 = arith.constant 0 : index
      %38 = vector.load %arg7[%c0_28, %c0_29, %c0_30, %c0_31] : memref<1x1x8x256xf32, #tpu.memory_space<vmem>>, vector<1x1x8x256xf32>
      %39 = vector.shape_cast %38 : vector<1x1x8x256xf32> to vector<8x256xf32>
      %40 = vector.shape_cast %37 : vector<8x256xf32> to vector<1x1x8x256xf32>
      tpu.vector_store %arg7[%c0_28, %c0_29, %c0_30, %c0_31], %40 {strides = array<i32>} : memref<1x1x8x256xf32, #tpu.memory_space<vmem>>, vector<1x1x8x256xf32>,
    } else {
    }
    %c0_5 = arith.constant 0 : index
    %c0_6 = arith.constant 0 : index
    %7 = vector.load %arg6[%c0_5, %c0_6] : memref<16x8xf32, #tpu.memory_space<vmem>>, vector<16x8xf32>
    %cst = arith.constant dense<0.000000e+00> : vector<16x256xf32>
    %8 = tpu.matmul %7, %3, %cst {dimension_numbers = #tpu.dot_dimension_numbers<[1], [0], [0], [1], [0, 0, 1, 1], [], []>} : vector<16x8xf32>, vector<8x256xf32>, vector<16x256xf32> -> vector<16x256xf32>
    %9 = vector.extract_strided_slice %8 {offsets = [0, 0], sizes = [8, 256], strides = [1, 1]} : vector<16x256xf32> to vector<8x256xf32>
    %10 = vector.extract_strided_slice %8 {offsets = [8, 0], sizes = [8, 256], strides = [1, 1]} : vector<16x256xf32> to vector<8x256xf32>
    %c0_7 = arith.constant 0 : index
    %c0_8 = arith.constant 0 : index
    %11 = vector.load %arg8[%c0_7, %c0_8] : memref<8x256xf32, #tpu.memory_space<vmem>>, vector<8x256xf32>
    %cst_9 = arith.constant dense<0.000000e+00> : vector<256x256xf32>
    %12 = tpu.matmul %9, %11, %cst_9 {dimension_numbers = #tpu.dot_dimension_numbers<[0], [0], [1], [1], [0, 1, 1, 1], [], []>} : vector<8x256xf32>, vector<8x256xf32>, vector<256x256xf32> -> vector<256x256xf32>
    %cst_10 = arith.constant dense<0xFF800000> : vector<256xf32>
    %13 = vector.multi_reduction <maximumf>, %12, %cst_10 [1] : vector<256x256xf32> to vector<256xf32>
    %14 = vector.shape_cast %13 : vector<256xf32> to vector<256x1xf32>
    %15 = vector.broadcast %14 : vector<256x1xf32> to vector<256x256xf32>
    %16 = arith.subf %12, %15 : vector<256x256xf32>
    %17 = math.exp %16 : vector<256x256xf32>
    %cst_11 = arith.constant dense<0.000000e+00> : vector<256xf32>
    %18 = vector.multi_reduction <add>, %17, %cst_11 [1] : vector<256x256xf32> to vector<256xf32>
    %19 = vector.shape_cast %18 : vector<256xf32> to vector<256x1xf32>
    %20 = tpu.reciprocal %19 {approx = true} : vector<256x1xf32> -> vector<256x1xf32>
    %21 = arith.mulf %19, %20 : vector<256x1xf32>
    %cst_12 = arith.constant 2.000000e+00 : f32
    %22 = vector.broadcast %cst_12 : f32 to vector<256x1xf32>
    %23 = arith.subf %22, %21 : vector<256x1xf32>
    %24 = arith.mulf %20, %23 : vector<256x1xf32>
    %25 = vector.broadcast %24 : vector<256x1xf32> to vector<256x256xf32>
    %26 = arith.mulf %17, %25 : vector<256x256xf32>
    %c0_13 = arith.constant 0 : index
    %c0_14 = arith.constant 0 : index
    %c0_15 = arith.constant 0 : index
    %c0_16 = arith.constant 0 : index
    %27 = vector.load %arg7[%c0_13, %c0_14, %c0_15, %c0_16] : memref<1x1x8x256xf32, #tpu.memory_space<vmem>>, vector<1x1x8x256xf32>
    %28 = vector.shape_cast %27 : vector<1x1x8x256xf32> to vector<8x256xf32>
    %cst_17 = arith.constant dense<0.000000e+00> : vector<8x256xf32>
    %29 = tpu.matmul %10, %26, %cst_17 {dimension_numbers = #tpu.dot_dimension_numbers<[1], [0], [0], [1], [0, 0, 1, 1], [], []>} : vector<8x256xf32>, vector<256x256xf32>, vector<8x256xf32> -> vector<8x256xf32>
    %30 = arith.addf %28, %29 : vector<8x256xf32>
    %c0_18 = arith.constant 0 : index
    %c0_19 = arith.constant 0 : index
    %c0_20 = arith.constant 0 : index
    %c0_21 = arith.constant 0 : index
    %31 = vector.load %arg7[%c0_18, %c0_19, %c0_20, %c0_21] : memref<1x1x8x256xf32, #tpu.memory_space<vmem>>, vector<1x1x8x256xf32>
    %32 = vector.shape_cast %31 : vector<1x1x8x256xf32> to vector<8x256xf32>
    %33 = vector.shape_cast %30 : vector<8x256xf32> to vector<1x1x8x256xf32>
    tpu.vector_store %arg7[%c0_18, %c0_19, %c0_20, %c0_21], %33 {strides = array<i32>} : memref<1x1x8x256xf32, #tpu.memory_space<vmem>>, vector<1x1x8x256xf32>,
    return
  }
  func.func @transform_0(%arg0: i32, %arg1: i32, %arg2: i32) -> (i32, i32, i32) {
    %c0_i32 = arith.constant 0 : i32
    %c0_i32_0 = arith.constant 0 : i32
    %c0_i32_1 = arith.constant 0 : i32
    return %arg1, %c0_i32, %c0_i32_0 : i32, i32, i32
  }
  func.func @transform_1(%arg0: i32, %arg1: i32, %arg2: i32) -> (i32, i32) {
    %c0_i32 = arith.constant 0 : i32
    %c0_i32_0 = arith.constant 0 : i32
    %c0_i32_1 = arith.constant 0 : i32
    return %c0_i32, %c0_i32_0 : i32, i32
  }
  func.func @transform_2(%arg0: i32, %arg1: i32, %arg2: i32) -> (i32, i32) {
    %c0_i32 = arith.constant 0 : i32
    %c0_i32_0 = arith.constant 0 : i32
    %c0_i32_1 = arith.constant 0 : i32
    return %c0_i32, %c0_i32_0 : i32, i32
  }
  func.func @transform_3(%arg0: i32, %arg1: i32, %arg2: i32) -> (i32, i32) {
    %c0_i32 = arith.constant 0 : i32
    %c0_i32_0 = arith.constant 0 : i32
    %c0_i32_1 = arith.constant 0 : i32
    return %c0_i32, %c0_i32_0 : i32, i32
  }
  func.func @transform_4(%arg0: i32, %arg1: i32, %arg2: i32) -> (i32, i32, i32, i32) {
    %c0_i32 = arith.constant 0 : i32
    %c0_i32_0 = arith.constant 0 : i32
    %c0_i32_1 = arith.constant 0 : i32
    return %arg0, %arg1, %c0_i32, %c0_i32_0 : i32, i32, i32, i32
  }
}

</mosaic_0001>

<llo_original>
// kernel: tpu_custom_call.1
$region0: #{tpu_custom_call.1}
  #allocation0 [shape = 'u32[]', space=smem, size = 0x4, offset = 0x4, fixed_abs, tag = 'smem constant byte address 0x4 - core index']
  #allocation1 [shape = 'u32[72,128]{1,0:T(1,128)}', space=vmem, size = 0x9000, scoped, tag = 'internal scratch']
  #allocation2 [shape = 'f32[8,256]{1,0:T(8,128)}', space=vmem, size = 0x2000, scoped, tag = 'scratch operand']
  %s0 = inlined_call_operand.hbm [shape: f32[2,8,256], index: 0, kind: input, shape index: {}]
  %s1 = inlined_call_operand.vmem [shape: f32[8,256], index: 1, kind: input, shape index: {}]
  %s2 = inlined_call_operand.vmem [shape: f32[8,8], index: 2, kind: input, shape index: {}]
  %s3 = inlined_call_operand.vmem [shape: f32[16,8], index: 3, kind: input, shape index: {}]
  %s4 = inlined_call_operand.hbm [shape: f32[1,2,8,256], index: 4, kind: output, shape index: {}]
  %s5 = sld [smem:[#allocation0]]
  $region57: #{tpu_custom_call.1} parent=0
    _
  %s7 = ssub.s32 1, %s5
  %s8 = scalar_select 0, %s7, %s5
  $region1: #{tpu_custom_call.1} parent=0
    #allocation3 [shape = 'u8[8192]{0}', space=vmem, size = 0x2000, scoped, tag = 'input window, operand 0, single buffered']
    #allocation4 [shape = 's32[2]{0}', space=sflag, size = 0x8, scoped, tag = 'scoped memory for tpu_custom_call.1']
    #allocation5 [shape = 's32[2]{0}', space=sflag, size = 0x8, scoped, tag = 'scoped memory for tpu_custom_call.1']
    #allocation6 [shape = 'u8[16384]{0}', space=vmem, size = 0x4000, scoped, tag = 'output window, operand 0']
    %9 = vsyncpa [#allocation4], 0
    %10 = vsyncpa [#allocation5], 0
    %s11 = scalar_lea.sflag [#allocation5], 1
    %12 = vsyncpa %s11, 0
    loop: start=0, step=1, limit=4
    $region2: #{tpu_custom_call.1} parent=1 // loop_pre_header
      _
    $region3: #{tpu_custom_call.1} parent=1 // loop_header
      %s14 = sphi 0, %s18
      %p15 = scmp.ge.s32.totalorder %s14, 4
      %s21 = sphi 0, %s40
      %s22 = sphi 0, %s36
      %s23 = sphi 0, %s32
      %s24 = sphi 0, %s21
      %s25 = sphi 0, %s22
      %s26 = sphi 0, %s23
      %s27 = sphi 0, %s24
      %s28 = sphi 0, %s25
      %s29 = sphi 0, %s26
      %s43 = sphi 0, %s45
      %s46 = sphi 0, %s43
      %s47 = sphi 0, %s46
      %s63 = sphi 0, %s47
      %s67 = sphi 0, %s67
      %s69 = sphi 0, %s67
      %s70 = sphi 0, %s69
      %s84 = sphi 0, %s70
      %s88 = sphi 0, %s88
      %s90 = sphi 0, %s88
      %s91 = sphi 0, %s90
      %s105 = sphi 0, %s91
      %s109 = sphi 0, %s109
      %s111 = sphi 0, %s109
      %s112 = sphi 0, %s111
      %s126 = sphi 0, %s112
      %s134 = sphi 0, %s136
      %s137 = sphi 0, %s134
      %s138 = sphi 0, %s137
      %s154 = sphi 0, %s138
    $region4: #{tpu_custom_call.1} parent=1 // loop_header_branch
      %17 = sbr.rel (%p15) target = $region8
    $region5: #{tpu_custom_call.1} parent=1 // loop_body
      %s19 = ssub.s32 %s14, 1
      %s20 = ssub.s32 %s14, 2
      %s30 = sadd.s32 1, %s23
      %p31 = scmp.ge.s32.totalorder %s30, 1
      %s32 = scalar_select %p31, 0, %s30
      %s33 = sadd.s32 1, %s22
      %s34 = scalar_select %p31, %s33, %s22
      %p35 = scmp.ge.s32.totalorder %s34, 2
      %s36 = scalar_select %p35, 0, %s34
      %s37 = sadd.s32 1, %s21
      %s38 = scalar_select %p35, %s37, %s21
      %p39 = scmp.ge.s32.totalorder %s38, 1
      %s40 = scalar_select %p39, 0, %s38
      %s41 = ssub.s32 %s22, %s36
      %p42 = scmp.eq.s32.totalorder %s41, 0
      %s44 = sadd.s32 %s43, 1
      %s45 = scalar_select %p42, %s43, %s44
      %p48 = pneg %p42
      %p49 = scmp.eq.s32.totalorder %s14, 1
      %p50 = por %p48, %p49
      %p51 = scmp.ne.s32.totalorder %s43, %s46
      %p52 = scmp.eq.s32.totalorder %s14, 0
      %p53 = por %p51, %p52
      %p54 = scmp.ne.s32.totalorder %s43, %s46
      %p55 = scmp.eq.s32.totalorder %s19, 1
      %p56 = por %p54, %p55
      %p57 = scmp.ne.s32.totalorder %s46, %s47
      %p58 = scmp.eq.s32.totalorder %s19, 0
      %p59 = por %p57, %p58
      %p60 = scmp.ne.s32.totalorder %s46, %s47
      %p61 = scmp.eq.s32.totalorder %s20, 1
      %p62 = por %p60, %p61
      %p64 = scmp.ne.s32.totalorder %s47, %s63
      %p65 = scmp.eq.s32.totalorder %s20, 0
      %p66 = por %p64, %p65
      %s68 = sadd.s32 %s67, 1
      %p71 = scmp.eq.s32.totalorder %s14, 1
      %p72 = scmp.ne.s32.totalorder %s67, %s69
      %p73 = scmp.eq.s32.totalorder %s14, 0
      %p74 = por %p72, %p73
      %p75 = scmp.ne.s32.totalorder %s67, %s69
      %p76 = scmp.eq.s32.totalorder %s19, 1
      %p77 = por %p75, %p76
      %p78 = scmp.ne.s32.totalorder %s69, %s70
      %p79 = scmp.eq.s32.totalorder %s19, 0
      %p80 = por %p78, %p79
      %p81 = scmp.ne.s32.totalorder %s69, %s70
      %p82 = scmp.eq.s32.totalorder %s20, 1
      %p83 = por %p81, %p82
      %p85 = scmp.ne.s32.totalorder %s70, %s84
      %p86 = scmp.eq.s32.totalorder %s20, 0
      %p87 = por %p85, %p86
      %s89 = sadd.s32 %s88, 1
      %p92 = scmp.eq.s32.totalorder %s14, 1
      %p93 = scmp.ne.s32.totalorder %s88, %s90
      %p94 = scmp.eq.s32.totalorder %s14, 0
      %p95 = por %p93, %p94
      %p96 = scmp.ne.s32.totalorder %s88, %s90
      %p97 = scmp.eq.s32.totalorder %s19, 1
      %p98 = por %p96, %p97
      %p99 = scmp.ne.s32.totalorder %s90, %s91
      %p100 = scmp.eq.s32.totalorder %s19, 0
      %p101 = por %p99, %p100
      %p102 = scmp.ne.s32.totalorder %s90, %s91
      %p103 = scmp.eq.s32.totalorder %s20, 1
      %p104 = por %p102, %p103
      %p106 = scmp.ne.s32.totalorder %s91, %s105
      %p107 = scmp.eq.s32.totalorder %s20, 0
      %p108 = por %p106, %p107
      %s110 = sadd.s32 %s109, 1
      %p113 = scmp.eq.s32.totalorder %s14, 1
      %p114 = scmp.ne.s32.totalorder %s109, %s111
      %p115 = scmp.eq.s32.totalorder %s14, 0
      %p116 = por %p114, %p115
      %p117 = scmp.ne.s32.totalorder %s109, %s111
      %p118 = scmp.eq.s32.totalorder %s19, 1
      %p119 = por %p117, %p118
      %p120 = scmp.ne.s32.totalorder %s111, %s112
      %p121 = scmp.eq.s32.totalorder %s19, 0
      %p122 = por %p120, %p121
      %p123 = scmp.ne.s32.totalorder %s111, %s112
      %p124 = scmp.eq.s32.totalorder %s20, 1
      %p125 = por %p123, %p124
      %p127 = scmp.ne.s32.totalorder %s112, %s126
      %p128 = scmp.eq.s32.totalorder %s20, 0
      %p129 = por %p127, %p128
      %s130 = ssub.s32 %s21, %s40
      %s131 = ssub.s32 %s22, %s36
      %s132 = sor.u32 %s130, %s131
      %p133 = scmp.eq.s32.totalorder %s132, 0
      %s135 = sadd.s32 %s134, 1
      %s136 = scalar_select %p133, %s134, %s135
      %p139 = pneg %p133
      %p140 = scmp.eq.s32.totalorder %s14, 1
      %p141 = por %p139, %p140
      %p142 = scmp.ne.s32.totalorder %s134, %s137
      %p143 = scmp.eq.s32.totalorder %s14, 0
      %p144 = por %p142, %p143
      %p145 = scmp.ne.s32.totalorder %s134, %s137
      %p146 = scmp.eq.s32.totalorder %s19, 1
      %p147 = por %p145, %p146
      %p148 = scmp.ne.s32.totalorder %s137, %s138
      %p149 = scmp.eq.s32.totalorder %s19, 0
      %p150 = por %p148, %p149
      %p151 = scmp.ne.s32.totalorder %s137, %s138
      %p152 = scmp.eq.s32.totalorder %s20, 1
      %p153 = por %p151, %p152
      %p155 = scmp.ne.s32.totalorder %s138, %s154
      %p156 = scmp.eq.s32.totalorder %s20, 0
      %p157 = por %p155, %p156
      %p158 = scmp.le.s32.totalorder 1, %s14
      %p159 = scmp.lt.s32.totalorder %s14, 3
      %p160 = pnand %p158, %p159
      %p161 = pneg %p160
      // Predicated region
      $region9: #{tpu_custom_call.1} parent=5 // pred_check
        _
      $region10: #{tpu_custom_call.1} parent=5 // pred_check_branch
        %163 = sbr.rel (%p160) target = $region12
      $region11: #{tpu_custom_call.1} parent=5 // pred_region
        %s164 = ssub.s32 %s14, 1
        // Predicated region
        $region13: #{tpu_custom_call.1} parent=11 // pred_check
          %p165 = pneg %p59
        $region14: #{tpu_custom_call.1} parent=11 // pred_check_branch
          %167 = sbr.rel (%p165) target = $region16
        $region15: #{tpu_custom_call.1} parent=11 // pred_region
          %169 = vsyncadd [#allocation4], 0
          %s170 = smul.addr %s25, 2
          %s171 = smul.addr %s170, 8
          %s172 = scalar_lea.hbm %s0, %s171
          %s174 = sshll.u32 %s172, 4
          %s175 = int_to_ptr.hbm [resolvable:$true] %s174
          %s176 = sshll.u32 [#allocation3], 4
          %s177 = int_to_ptr.vmem [resolvable:$true] %s176
          %179 = dma.hbm_to_vmem [thread:$0]  %s175, 256, %s177, [#allocation4]
        $region16: #{tpu_custom_call.1} parent=11 // pred_fallthru
          _
        // Predicated region
        $region17: #{tpu_custom_call.1} parent=11 // pred_check
          %p180 = pneg %p80
        $region18: #{tpu_custom_call.1} parent=11 // pred_check_branch
          %182 = sbr.rel (%p180) target = $region20
        $region19: #{tpu_custom_call.1} parent=11 // pred_region
          _
        $region20: #{tpu_custom_call.1} parent=11 // pred_fallthru
          _
        // Predicated region
        $region21: #{tpu_custom_call.1} parent=11 // pred_check
          %p183 = pneg %p101
        $region22: #{tpu_custom_call.1} parent=11 // pred_check_branch
          %185 = sbr.rel (%p183) target = $region24
        $region23: #{tpu_custom_call.1} parent=11 // pred_region
          _
        $region24: #{tpu_custom_call.1} parent=11 // pred_fallthru
          _
        // Predicated region
        $region25: #{tpu_custom_call.1} parent=11 // pred_check
          %p186 = pneg %p122
        $region26: #{tpu_custom_call.1} parent=11 // pred_check_branch
          %188 = sbr.rel (%p186) target = $region28
        $region27: #{tpu_custom_call.1} parent=11 // pred_region
          _
        $region28: #{tpu_custom_call.1} parent=11 // pred_fallthru
          _
      $region12: #{tpu_custom_call.1} parent=5 // pred_fallthru
        _
      %p189 = scmp.lt.s32.totalorder %s14, 2
      // Predicated region
      $region29: #{tpu_custom_call.1} parent=5 // pred_check
        %p190 = pneg %p189
      $region30: #{tpu_custom_call.1} parent=5 // pred_check_branch
        %192 = sbr.rel (%p190) target = $region32
      $region31: #{tpu_custom_call.1} parent=5 // pred_region
        _
      $region32: #{tpu_custom_call.1} parent=5 // pred_fallthru
        _
      %p193 = scmp.le.s32.totalorder 1, %s14
      %p194 = scmp.lt.s32.totalorder %s14, 3
      %p195 = pnand %p193, %p194
      %p196 = pneg %p195
      // Predicated region
      $region33: #{tpu_custom_call.1} parent=5 // pred_check
        _
      $region34: #{tpu_custom_call.1} parent=5 // pred_check_branch
        %198 = sbr.rel (%p195) target = $region36
      $region35: #{tpu_custom_call.1} parent=5 // pred_region
        %s199 = ssub.s32 %s14, 1
        // Predicated region
        $region37: #{tpu_custom_call.1} parent=35 // pred_check
          %p200 = pneg %p59
        $region38: #{tpu_custom_call.1} parent=35 // pred_check_branch
          %202 = sbr.rel (%p200) target = $region40
        $region39: #{tpu_custom_call.1} parent=35 // pred_region
          %204 = dma.done [#allocation4], 256
        $region40: #{tpu_custom_call.1} parent=35 // pred_fallthru
          _
        %p205 = pneg %p59
        %p206 = pneg %p56
        %p207 = pneg %p80
        %p208 = pneg %p77
        %p209 = pneg %p101
        %p210 = pneg %p98
        %p211 = pneg %p122
        %p212 = pneg %p119
        %p213 = pneg %p150
        %p214 = pneg %p147
        %s215 = sand.u32 %s137, 1
        %s216 = scalar_lea.sflag [#allocation5], %s215
        %s217 = sand.u32 %s137, 1
        %s218 = smul.addr %s217, 16
        %s219 = scalar_lea.vmem [#allocation6], %s218
        %v220 = vld [vmem:[#allocation3] sm:$0xff]
        %v221 = vld [vmem:[#allocation3 + $0x8] sm:$0xff]
        %v222 = vld [vmem:[%s1] sm:$0xff]
        %v223 = vld [vmem:[%s1 + $0x8] sm:$0xff]
        %v224 = vadd.f32 %v220, %v222
        %v225 = vadd.f32 %v221, %v223
        %p226 = scmp.eq.s32.totalorder %s26, 0
        // Predicated region
        $region41: #{tpu_custom_call.1} parent=35 // pred_check
          %p227 = pneg %p226
        $region42: #{tpu_custom_call.1} parent=35 // pred_check_branch
          %229 = sbr.rel (%p227) target = $region44
        $region43: #{tpu_custom_call.1} parent=35 // pred_region
          %v230 = vld [vmem:[%s2] sm:$0xff]
          %vm231 = vcmask 64512
          %v233 = vsel %vm231, %v230, 0
          %235 = vmatpush.msra.mxu0 0.0
          %236 = vmatpush.msra.mxu0 0.0
          %237 = vmatpush.msra.mxu0 0.0
          %238 = vmatpush.msra.mxu0 0.0
          %239 = vmatpush.msra.mxu0 0.0
          %240 = vmatpush.msra.mxu0 0.0
          %241 = vmatpush.msra.mxu0 0.0
          %242 = vmatpush.msra.mxu0 0.0
          %243 = vmatpush.msra.mxu0 0.0
          %244 = vmatpush.msra.mxu0 0.0
          %245 = vmatpush.msra.mxu0 0.0
          %246 = vmatpush.msra.mxu0 0.0
          %247 = vmatpush.msra.mxu0 0.0
          %248 = vmatpush.msra.mxu0 0.0
          %249 = vmatpush.msra.mxu0 0.0
          %250 = vmatpush.msra.mxu0 %v224
          %251 = vmatmul.f32.gmra.mxu0 %v233
          %v252 = vpop.f32.mrf.mxu0
          %v253 = vadd.f32 0.0, %v252
          %254 = vdwg.mxu0
          %255 = vmatpush.msra.mxu0 0.0
          %256 = vmatpush.msra.mxu0 0.0
          %257 = vmatpush.msra.mxu0 0.0
          %258 = vmatpush.msra.mxu0 0.0
          %259 = vmatpush.msra.mxu0 0.0
          %260 = vmatpush.msra.mxu0 0.0
          %261 = vmatpush.msra.mxu0 0.0
          %262 = vmatpush.msra.mxu0 0.0
          %263 = vmatpush.msra.mxu0 0.0
          %264 = vmatpush.msra.mxu0 0.0
          %265 = vmatpush.msra.mxu0 0.0
          %266 = vmatpush.msra.mxu0 0.0
          %267 = vmatpush.msra.mxu0 0.0
          %268 = vmatpush.msra.mxu0 0.0
          %269 = vmatpush.msra.mxu0 0.0
          %270 = vmatpush.msra.mxu0 %v225
          %271 = vmatmul.f32.gmra.mxu0 %v233
          %v272 = vpop.f32.mrf.mxu0
          %v273 = vadd.f32 0.0, %v272
          %274 = vdwg.mxu0
          %275 = vst [vmem:[#allocation2] sm:$0xff] %v253
          %276 = vst [vmem:[#allocation2 + $0x8] sm:$0xff] %v273
          %277 = vst [vmem:[%s219] sm:$0xff] 0.0
          %278 = vst [vmem:[%s219 + $0x8] sm:$0xff] 0.0
        $region44: #{tpu_custom_call.1} parent=35 // pred_fallthru
          _
        %v279 = vld [vmem:[%s3] sm:$0xff]
        %v280 = vld [vmem:[%s3 + $0x8] sm:$0xff]
        %vm281 = vcmask 64512
        %v283 = vsel %vm281, %v279, 0
        %v286 = vsel %vm281, %v280, 0
        %288 = vmatpush.msra.mxu0 0.0
        %289 = vmatpush.msra.mxu0 0.0
        %290 = vmatpush.msra.mxu0 0.0
        %291 = vmatpush.msra.mxu0 0.0
        %292 = vmatpush.msra.mxu0 0.0
        %293 = vmatpush.msra.mxu0 0.0
        %294 = vmatpush.msra.mxu0 0.0
        %295 = vmatpush.msra.mxu0 0.0
        %296 = vmatpush.msra.mxu0 0.0
        %297 = vmatpush.msra.mxu0 0.0
        %298 = vmatpush.msra.mxu0 0.0
        %299 = vmatpush.msra.mxu0 0.0
        %300 = vmatpush.msra.mxu0 0.0
        %301 = vmatpush.msra.mxu0 0.0
        %302 = vmatpush.msra.mxu0 0.0
        %303 = vmatpush.msra.mxu0 %v224
        %304 = vmatmul.f32.gmra.mxu0 %v283
        %v305 = vpop.f32.mrf.mxu0
        %v306 = vadd.f32 0.0, %v305
        %307 = vmatmul.f32.gmra.mxu0 %v286
        %v308 = vpop.f32.mrf.mxu0
        %v309 = vadd.f32 0.0, %v308
        %310 = vdwg.mxu0
        %311 = vmatpush.msra.mxu0 0.0
        %312 = vmatpush.msra.mxu0 0.0
        %313 = vmatpush.msra.mxu0 0.0
        %314 = vmatpush.msra.mxu0 0.0
        %315 = vmatpush.msra.mxu0 0.0
        %316 = vmatpush.msra.mxu0 0.0
        %317 = vmatpush.msra.mxu0 0.0
        %318 = vmatpush.msra.mxu0 0.0
        %319 = vmatpush.msra.mxu0 0.0
        %320 = vmatpush.msra.mxu0 0.0
        %321 = vmatpush.msra.mxu0 0.0
        %322 = vmatpush.msra.mxu0 0.0
        %323 = vmatpush.msra.mxu0 0.0
        %324 = vmatpush.msra.mxu0 0.0
        %325 = vmatpush.msra.mxu0 0.0
        %326 = vmatpush.msra.mxu0 %v225
        %327 = vmatmul.f32.gmra.mxu0 %v283
        %v328 = vpop.f32.mrf.mxu0
        %v329 = vadd.f32 0.0, %v328
        %330 = vmatmul.f32.gmra.mxu0 %v286
        %v331 = vpop.f32.mrf.mxu0
        %v332 = vadd.f32 0.0, %v331
        %333 = vdwg.mxu0
        %v334 = vld [vmem:[#allocation2] sm:$0xff]
        %v335 = vld [vmem:[#allocation2 + $0x8] sm:$0xff]
        %336 = vxpose.xlu0.b32.start [1/16] %v306, 128
        %337 = vxpose.xlu0.b32.cont [2/16] 0.0, 128
        %338 = vxpose.xlu0.b32.cont [3/16] 0.0, 128
        %339 = vxpose.xlu0.b32.cont [4/16] 0.0, 128
        %340 = vxpose.xlu0.b32.cont [5/16] 0.0, 128
        %341 = vxpose.xlu0.b32.cont [6/16] 0.0, 128
        %342 = vxpose.xlu0.b32.cont [7/16] 0.0, 128
        %343 = vxpose.xlu0.b32.cont [8/16] 0.0, 128
        %344 = vxpose.xlu0.b32.cont [9/16] 0.0, 128
        %345 = vxpose.xlu0.b32.cont [10/16] 0.0, 128
        %346 = vxpose.xlu0.b32.cont [11/16] 0.0, 128
        %347 = vxpose.xlu0.b32.cont [12/16] 0.0, 128
        %348 = vxpose.xlu0.b32.cont [13/16] 0.0, 128
        %349 = vxpose.xlu0.b32.cont [14/16] 0.0, 128
        %350 = vxpose.xlu0.b32.cont [15/16] 0.0, 128
        %351 = vxpose.xlu0.b32.end [16/16] 0.0, 128
        %v352 = vpop.trf.xlu0
        %v353 = vpop.trf.xlu0
        %v354 = vpop.trf.xlu0
        %v355 = vpop.trf.xlu0
        %v356 = vpop.trf.xlu0
        %v357 = vpop.trf.xlu0
        %v358 = vpop.trf.xlu0
        %v359 = vpop.trf.xlu0
        %v360 = vpop.trf.xlu0
        %v361 = vpop.trf.xlu0
        %v362 = vpop.trf.xlu0
        %v363 = vpop.trf.xlu0
        %v364 = vpop.trf.xlu0
        %v365 = vpop.trf.xlu0
        %v366 = vpop.trf.xlu0
        %v367 = vpop.trf.xlu0
        %368 = vxpose.xlu0.b32.start [1/16] %v329, 128
        %369 = vxpose.xlu0.b32.cont [2/16] 0.0, 128
        %370 = vxpose.xlu0.b32.cont [3/16] 0.0, 128
        %371 = vxpose.xlu0.b32.cont [4/16] 0.0, 128
        %372 = vxpose.xlu0.b32.cont [5/16] 0.0, 128
        %373 = vxpose.xlu0.b32.cont [6/16] 0.0, 128
        %374 = vxpose.xlu0.b32.cont [7/16] 0.0, 128
        %375 = vxpose.xlu0.b32.cont [8/16] 0.0, 128
        %376 = vxpose.xlu0.b32.cont [9/16] 0.0, 128
        %377 = vxpose.xlu0.b32.cont [10/16] 0.0, 128
        %378 = vxpose.xlu0.b32.cont [11/16] 0.0, 128
        %379 = vxpose.xlu0.b32.cont [12/16] 0.0, 128
        %380 = vxpose.xlu0.b32.cont [13/16] 0.0, 128
        %381 = vxpose.xlu0.b32.cont [14/16] 0.0, 128
        %382 = vxpose.xlu0.b32.cont [15/16] 0.0, 128
        %383 = vxpose.xlu0.b32.end [16/16] 0.0, 128
        %v384 = vpop.trf.xlu0
        %v385 = vpop.trf.xlu0
        %v386 = vpop.trf.xlu0
        %v387 = vpop.trf.xlu0
        %v388 = vpop.trf.xlu0
        %v389 = vpop.trf.xlu0
        %v390 = vpop.trf.xlu0
        %v391 = vpop.trf.xlu0
        %v392 = vpop.trf.xlu0
        %v393 = vpop.trf.xlu0
        %v394 = vpop.trf.xlu0
        %v395 = vpop.trf.xlu0
        %v396 = vpop.trf.xlu0
        %v397 = vpop.trf.xlu0
        %v398 = vpop.trf.xlu0
        %v399 = vpop.trf.xlu0
        %v401 = vsel %vm281, %v352, 0
        %v404 = vsel %vm281, %v353, 0
        %v407 = vsel %vm281, %v354, 0
        %v410 = vsel %vm281, %v355, 0
        %v413 = vsel %vm281, %v356, 0
        %v416 = vsel %vm281, %v357, 0
        %v419 = vsel %vm281, %v358, 0
        %v422 = vsel %vm281, %v359, 0
        %v425 = vsel %vm281, %v360, 0
        %v428 = vsel %vm281, %v361, 0
        %v431 = vsel %vm281, %v362, 0
        %v434 = vsel %vm281, %v363, 0
        %v437 = vsel %vm281, %v364, 0
        %v440 = vsel %vm281, %v365, 0
        %v443 = vsel %vm281, %v366, 0
        %v446 = vsel %vm281, %v367, 0
        %v449 = vsel %vm281, %v384, 0
        %v452 = vsel %vm281, %v385, 0
        %v455 = vsel %vm281, %v386, 0
        %v458 = vsel %vm281, %v387, 0
        %v461 = vsel %vm281, %v388, 0
        %v464 = vsel %vm281, %v389, 0
        %v467 = vsel %vm281, %v390, 0
        %v470 = vsel %vm281, %v391, 0
        %v473 = vsel %vm281, %v392, 0
        %v476 = vsel %vm281, %v393, 0
        %v479 = vsel %vm281, %v394, 0
        %v482 = vsel %vm281, %v395, 0
        %v485 = vsel %vm281, %v396, 0
        %v488 = vsel %vm281, %v397, 0
        %v491 = vsel %vm281, %v398, 0
        %v494 = vsel %vm281, %v399, 0
        %496 = vmatpush.msra.mxu0 0.0
        %497 = vmatpush.msra.mxu0 0.0
        %498 = vmatpush.msra.mxu0 0.0
        %499 = vmatpush.msra.mxu0 0.0
        %500 = vmatpush.msra.mxu0 0.0
        %501 = vmatpush.msra.mxu0 0.0
        %502 = vmatpush.msra.mxu0 0.0
        %503 = vmatpush.msra.mxu0 0.0
        %504 = vmatpush.msra.mxu0 0.0
        %505 = vmatpush.msra.mxu0 0.0
        %506 = vmatpush.msra.mxu0 0.0
        %507 = vmatpush.msra.mxu0 0.0
        %508 = vmatpush.msra.mxu0 0.0
        %509 = vmatpush.msra.mxu0 0.0
        %510 = vmatpush.msra.mxu0 0.0
        %511 = vmatpush.msra.mxu0 %v334
        %512 = vmatmul.f32.gmra.mxu0 %v401
        %v513 = vpop.f32.mrf.mxu0
        %v514 = vadd.f32 0.0, %v513
        %515 = vmatmul.f32.gmra.mxu0 %v404
        %v516 = vpop.f32.mrf.mxu0
        %v517 = vadd.f32 0.0, %v516
        %518 = vmatmul.f32.gmra.mxu0 %v407
        %v519 = vpop.f32.mrf.mxu0
        %v520 = vadd.f32 0.0, %v519
        %521 = vmatmul.f32.gmra.mxu0 %v410
        %v522 = vpop.f32.mrf.mxu0
        %v523 = vadd.f32 0.0, %v522
        %524 = vmatmul.f32.gmra.mxu0 %v413
        %v525 = vpop.f32.mrf.mxu0
        %v526 = vadd.f32 0.0, %v525
        %527 = vmatmul.f32.gmra.mxu0 %v416
        %v528 = vpop.f32.mrf.mxu0
        %v529 = vadd.f32 0.0, %v528
        %530 = vmatmul.f32.gmra.mxu0 %v419
        %v531 = vpop.f32.mrf.mxu0
        %v532 = vadd.f32 0.0, %v531
        %533 = vmatmul.f32.gmra.mxu0 %v422
        %v534 = vpop.f32.mrf.mxu0
        %v535 = vadd.f32 0.0, %v534
        %536 = vmatmul.f32.gmra.mxu0 %v425
        %v537 = vpop.f32.mrf.mxu0
        %v538 = vadd.f32 0.0, %v537
        %539 = vmatmul.f32.gmra.mxu0 %v428
        %v540 = vpop.f32.mrf.mxu0
        %v541 = vadd.f32 0.0, %v540
        %542 = vmatmul.f32.gmra.mxu0 %v431
        %v543 = vpop.f32.mrf.mxu0
        %v544 = vadd.f32 0.0, %v543
        %545 = vmatmul.f32.gmra.mxu0 %v434
        %v546 = vpop.f32.mrf.mxu0
        %v547 = vadd.f32 0.0, %v546
        %548 = vmatmul.f32.gmra.mxu0 %v437
        %v549 = vpop.f32.mrf.mxu0
        %v550 = vadd.f32 0.0, %v549
        %551 = vmatmul.f32.gmra.mxu0 %v440
        %v552 = vpop.f32.mrf.mxu0
        %v553 = vadd.f32 0.0, %v552
        %554 = vmatmul.f32.gmra.mxu0 %v443
        %v555 = vpop.f32.mrf.mxu0
        %v556 = vadd.f32 0.0, %v555
        %557 = vmatmul.f32.gmra.mxu0 %v446
        %v558 = vpop.f32.mrf.mxu0
        %v559 = vadd.f32 0.0, %v558
        %560 = vmatmul.f32.gmra.mxu0 %v449
        %v561 = vpop.f32.mrf.mxu0
        %v562 = vadd.f32 0.0, %v561
        %563 = vmatmul.f32.gmra.mxu0 %v452
        %v564 = vpop.f32.mrf.mxu0
        %v565 = vadd.f32 0.0, %v564
        %566 = vmatmul.f32.gmra.mxu0 %v455
        %v567 = vpop.f32.mrf.mxu0
        %v568 = vadd.f32 0.0, %v567
        %569 = vmatmul.f32.gmra.mxu0 %v458
        %v570 = vpop.f32.mrf.mxu0
        %v571 = vadd.f32 0.0, %v570
        %572 = vmatmul.f32.gmra.mxu0 %v461
        %v573 = vpop.f32.mrf.mxu0
        %v574 = vadd.f32 0.0, %v573
        %575 = vmatmul.f32.gmra.mxu0 %v464
        %v576 = vpop.f32.mrf.mxu0
        %v577 = vadd.f32 0.0, %v576
        %578 = vmatmul.f32.gmra.mxu0 %v467
        %v579 = vpop.f32.mrf.mxu0
        %v580 = vadd.f32 0.0, %v579
        %581 = vmatmul.f32.gmra.mxu0 %v470
        %v582 = vpop.f32.mrf.mxu0
        %v583 = vadd.f32 0.0, %v582
        %584 = vmatmul.f32.gmra.mxu0 %v473
        %v585 = vpop.f32.mrf.mxu0
        %v586 = vadd.f32 0.0, %v585
        %587 = vmatmul.f32.gmra.mxu0 %v476
        %v588 = vpop.f32.mrf.mxu0
        %v589 = vadd.f32 0.0, %v588
        %590 = vmatmul.f32.gmra.mxu0 %v479
        %v591 = vpop.f32.mrf.mxu0
        %v592 = vadd.f32 0.0, %v591
        %593 = vmatmul.f32.gmra.mxu0 %v482
        %v594 = vpop.f32.mrf.mxu0
        %v595 = vadd.f32 0.0, %v594
        %596 = vmatmul.f32.gmra.mxu0 %v485
        %v597 = vpop.f32.mrf.mxu0
        %v598 = vadd.f32 0.0, %v597
        %599 = vmatmul.f32.gmra.mxu0 %v488
        %v600 = vpop.f32.mrf.mxu0
        %v601 = vadd.f32 0.0, %v600
        %602 = vmatmul.f32.gmra.mxu0 %v491
        %v603 = vpop.f32.mrf.mxu0
        %v604 = vadd.f32 0.0, %v603
        %605 = vmatmul.f32.gmra.mxu0 %v494
        %v606 = vpop.f32.mrf.mxu0
        %v607 = vadd.f32 0.0, %v606
        %608 = vdwg.mxu0
        %609 = vmatpush.msra.mxu0 0.0
        %610 = vmatpush.msra.mxu0 0.0
        %611 = vmatpush.msra.mxu0 0.0
        %612 = vmatpush.msra.mxu0 0.0
        %613 = vmatpush.msra.mxu0 0.0
        %614 = vmatpush.msra.mxu0 0.0
        %615 = vmatpush.msra.mxu0 0.0
        %616 = vmatpush.msra.mxu0 0.0
        %617 = vmatpush.msra.mxu0 0.0
        %618 = vmatpush.msra.mxu0 0.0
        %619 = vmatpush.msra.mxu0 0.0
        %620 = vmatpush.msra.mxu0 0.0
        %621 = vmatpush.msra.mxu0 0.0
        %622 = vmatpush.msra.mxu0 0.0
        %623 = vmatpush.msra.mxu0 0.0
        %624 = vmatpush.msra.mxu0 %v335
        %625 = vmatmul.f32.gmra.mxu0 %v401
        %v626 = vpop.f32.mrf.mxu0
        %v627 = vadd.f32 0.0, %v626
        %628 = vmatmul.f32.gmra.mxu0 %v404
        %v629 = vpop.f32.mrf.mxu0
        %v630 = vadd.f32 0.0, %v629
        %631 = vmatmul.f32.gmra.mxu0 %v407
        %v632 = vpop.f32.mrf.mxu0
        %v633 = vadd.f32 0.0, %v632
        %634 = vmatmul.f32.gmra.mxu0 %v410
        %v635 = vpop.f32.mrf.mxu0
        %v636 = vadd.f32 0.0, %v635
        %637 = vmatmul.f32.gmra.mxu0 %v413
        %v638 = vpop.f32.mrf.mxu0
        %v639 = vadd.f32 0.0, %v638
        %640 = vmatmul.f32.gmra.mxu0 %v416
        %v641 = vpop.f32.mrf.mxu0
        %v642 = vadd.f32 0.0, %v641
        %643 = vmatmul.f32.gmra.mxu0 %v419
        %v644 = vpop.f32.mrf.mxu0
        %v645 = vadd.f32 0.0, %v644
        %646 = vmatmul.f32.gmra.mxu0 %v422
        %v647 = vpop.f32.mrf.mxu0
        %v648 = vadd.f32 0.0, %v647
        %649 = vmatmul.f32.gmra.mxu0 %v425
        %v650 = vpop.f32.mrf.mxu0
        %v651 = vadd.f32 0.0, %v650
        %652 = vmatmul.f32.gmra.mxu0 %v428
        %v653 = vpop.f32.mrf.mxu0
        %v654 = vadd.f32 0.0, %v653
        %655 = vmatmul.f32.gmra.mxu0 %v431
        %v656 = vpop.f32.mrf.mxu0
        %v657 = vadd.f32 0.0, %v656
        %658 = vmatmul.f32.gmra.mxu0 %v434
        %v659 = vpop.f32.mrf.mxu0
        %v660 = vadd.f32 0.0, %v659
        %661 = vmatmul.f32.gmra.mxu0 %v437
        %v662 = vpop.f32.mrf.mxu0
        %v663 = vadd.f32 0.0, %v662
        %664 = vmatmul.f32.gmra.mxu0 %v440
        %v665 = vpop.f32.mrf.mxu0
        %v666 = vadd.f32 0.0, %v665
        %667 = vmatmul.f32.gmra.mxu0 %v443
        %v668 = vpop.f32.mrf.mxu0
        %v669 = vadd.f32 0.0, %v668
        %670 = vmatmul.f32.gmra.mxu0 %v446
        %v671 = vpop.f32.mrf.mxu0
        %v672 = vadd.f32 0.0, %v671
        %673 = vmatmul.f32.gmra.mxu0 %v449
        %v674 = vpop.f32.mrf.mxu0
        %v675 = vadd.f32 0.0, %v674
        %676 = vmatmul.f32.gmra.mxu0 %v452
        %v677 = vpop.f32.mrf.mxu0
        %v678 = vadd.f32 0.0, %v677
        %679 = vmatmul.f32.gmra.mxu0 %v455
        %v680 = vpop.f32.mrf.mxu0
        %v681 = vadd.f32 0.0, %v680
        %682 = vmatmul.f32.gmra.mxu0 %v458
        %v683 = vpop.f32.mrf.mxu0
        %v684 = vadd.f32 0.0, %v683
        %685 = vmatmul.f32.gmra.mxu0 %v461
        %v686 = vpop.f32.mrf.mxu0
        %v687 = vadd.f32 0.0, %v686
        %688 = vmatmul.f32.gmra.mxu0 %v464
        %v689 = vpop.f32.mrf.mxu0
        %v690 = vadd.f32 0.0, %v689
        %691 = vmatmul.f32.gmra.mxu0 %v467
        %v692 = vpop.f32.mrf.mxu0
        %v693 = vadd.f32 0.0, %v692
        %694 = vmatmul.f32.gmra.mxu0 %v470
        %v695 = vpop.f32.mrf.mxu0
        %v696 = vadd.f32 0.0, %v695
        %697 = vmatmul.f32.gmra.mxu0 %v473
        %v698 = vpop.f32.mrf.mxu0
        %v699 = vadd.f32 0.0, %v698
        %700 = vmatmul.f32.gmra.mxu0 %v476
        %v701 = vpop.f32.mrf.mxu0
        %v702 = vadd.f32 0.0, %v701
        %703 = vmatmul.f32.gmra.mxu0 %v479
        %v704 = vpop.f32.mrf.mxu0
        %v705 = vadd.f32 0.0, %v704
        %706 = vmatmul.f32.gmra.mxu0 %v482
        %v707 = vpop.f32.mrf.mxu0
        %v708 = vadd.f32 0.0, %v707
        %709 = vmatmul.f32.gmra.mxu0 %v485
        %v710 = vpop.f32.mrf.mxu0
        %v711 = vadd.f32 0.0, %v710
        %712 = vmatmul.f32.gmra.mxu0 %v488
        %v713 = vpop.f32.mrf.mxu0
        %v714 = vadd.f32 0.0, %v713
        %715 = vmatmul.f32.gmra.mxu0 %v491
        %v716 = vpop.f32.mrf.mxu0
        %v717 = vadd.f32 0.0, %v716
        %718 = vmatmul.f32.gmra.mxu0 %v494
        %v719 = vpop.f32.mrf.mxu0
        %v720 = vadd.f32 0.0, %v719
        %721 = vdwg.mxu0
        %v722 = vmax.f32 %v514, %v627
        %723 = vmax.xlane.f32.xlu0 %v722
        %v724 = vpop.xlane.xlu0 %723
        %v725 = vmax.f32 %v517, %v630
        %726 = vmax.xlane.f32.xlu0 %v725
        %v727 = vpop.xlane.xlu0 %726
        %v728 = vmax.f32 %v520, %v633
        %729 = vmax.xlane.f32.xlu0 %v728
        %v730 = vpop.xlane.xlu0 %729
        %v731 = vmax.f32 %v523, %v636
        %732 = vmax.xlane.f32.xlu0 %v731
        %v733 = vpop.xlane.xlu0 %732
        %v734 = vmax.f32 %v526, %v639
        %735 = vmax.xlane.f32.xlu0 %v734
        %v736 = vpop.xlane.xlu0 %735
        %v737 = vmax.f32 %v529, %v642
        %738 = vmax.xlane.f32.xlu0 %v737
        %v739 = vpop.xlane.xlu0 %738
        %v740 = vmax.f32 %v532, %v645
        %741 = vmax.xlane.f32.xlu0 %v740
        %v742 = vpop.xlane.xlu0 %741
        %v743 = vmax.f32 %v535, %v648
        %744 = vmax.xlane.f32.xlu0 %v743
        %v745 = vpop.xlane.xlu0 %744
        %v746 = vmax.f32 %v538, %v651
        %747 = vmax.xlane.f32.xlu0 %v746
        %v748 = vpop.xlane.xlu0 %747
        %v749 = vmax.f32 %v541, %v654
        %750 = vmax.xlane.f32.xlu0 %v749
        %v751 = vpop.xlane.xlu0 %750
        %v752 = vmax.f32 %v544, %v657
        %753 = vmax.xlane.f32.xlu0 %v752
        %v754 = vpop.xlane.xlu0 %753
        %v755 = vmax.f32 %v547, %v660
        %756 = vmax.xlane.f32.xlu0 %v755
        %v757 = vpop.xlane.xlu0 %756
        %v758 = vmax.f32 %v550, %v663
        %759 = vmax.xlane.f32.xlu0 %v758
        %v760 = vpop.xlane.xlu0 %759
        %v761 = vmax.f32 %v553, %v666
        %762 = vmax.xlane.f32.xlu0 %v761
        %v763 = vpop.xlane.xlu0 %762
        %v764 = vmax.f32 %v556, %v669
        %765 = vmax.xlane.f32.xlu0 %v764
        %v766 = vpop.xlane.xlu0 %765
        %v767 = vmax.f32 %v559, %v672
        %768 = vmax.xlane.f32.xlu0 %v767
        %v769 = vpop.xlane.xlu0 %768
        %v770 = vmax.f32 %v562, %v675
        %771 = vmax.xlane.f32.xlu0 %v770
        %v772 = vpop.xlane.xlu0 %771
        %v773 = vmax.f32 %v565, %v678
        %774 = vmax.xlane.f32.xlu0 %v773
        %v775 = vpop.xlane.xlu0 %774
        %v776 = vmax.f32 %v568, %v681
        %777 = vmax.xlane.f32.xlu0 %v776
        %v778 = vpop.xlane.xlu0 %777
        %v779 = vmax.f32 %v571, %v684
        %780 = vmax.xlane.f32.xlu0 %v779
        %v781 = vpop.xlane.xlu0 %780
        %v782 = vmax.f32 %v574, %v687
        %783 = vmax.xlane.f32.xlu0 %v782
        %v784 = vpop.xlane.xlu0 %783
        %v785 = vmax.f32 %v577, %v690
        %786 = vmax.xlane.f32.xlu0 %v785
        %v787 = vpop.xlane.xlu0 %786
        %v788 = vmax.f32 %v580, %v693
        %789 = vmax.xlane.f32.xlu0 %v788
        %v790 = vpop.xlane.xlu0 %789
        %v791 = vmax.f32 %v583, %v696
        %792 = vmax.xlane.f32.xlu0 %v791
        %v793 = vpop.xlane.xlu0 %792
        %v794 = vmax.f32 %v586, %v699
        %795 = vmax.xlane.f32.xlu0 %v794
        %v796 = vpop.xlane.xlu0 %795
        %v797 = vmax.f32 %v589, %v702
        %798 = vmax.xlane.f32.xlu0 %v797
        %v799 = vpop.xlane.xlu0 %798
        %v800 = vmax.f32 %v592, %v705
        %801 = vmax.xlane.f32.xlu0 %v800
        %v802 = vpop.xlane.xlu0 %801
        %v803 = vmax.f32 %v595, %v708
        %804 = vmax.xlane.f32.xlu0 %v803
        %v805 = vpop.xlane.xlu0 %804
        %v806 = vmax.f32 %v598, %v711
        %807 = vmax.xlane.f32.xlu0 %v806
        %v808 = vpop.xlane.xlu0 %807
        %v809 = vmax.f32 %v601, %v714
        %810 = vmax.xlane.f32.xlu0 %v809
        %v811 = vpop.xlane.xlu0 %810
        %v812 = vmax.f32 %v604, %v717
        %813 = vmax.xlane.f32.xlu0 %v812
        %v814 = vpop.xlane.xlu0 %813
        %v815 = vmax.f32 %v607, %v720
        %816 = vmax.xlane.f32.xlu0 %v815
        %v817 = vpop.xlane.xlu0 %816
        %v818 = vsub.f32 %v514, %v724
        %v819 = vsub.f32 %v627, %v724
        %v820 = vsub.f32 %v517, %v727
        %v821 = vsub.f32 %v630, %v727
        %v822 = vsub.f32 %v520, %v730
        %v823 = vsub.f32 %v633, %v730
        %v824 = vsub.f32 %v523, %v733
        %v825 = vsub.f32 %v636, %v733
        %v826 = vsub.f32 %v526, %v736
        %v827 = vsub.f32 %v639, %v736
        %v828 = vsub.f32 %v529, %v739
        %v829 = vsub.f32 %v642, %v739
        %v830 = vsub.f32 %v532, %v742
        %v831 = vsub.f32 %v645, %v742
        %v832 = vsub.f32 %v535, %v745
        %v833 = vsub.f32 %v648, %v745
        %v834 = vsub.f32 %v538, %v748
        %v835 = vsub.f32 %v651, %v748
        %v836 = vsub.f32 %v541, %v751
        %v837 = vsub.f32 %v654, %v751
        %v838 = vsub.f32 %v544, %v754
        %v839 = vsub.f32 %v657, %v754
        %v840 = vsub.f32 %v547, %v757
        %v841 = vsub.f32 %v660, %v757
        %v842 = vsub.f32 %v550, %v760
        %v843 = vsub.f32 %v663, %v760
        %v844 = vsub.f32 %v553, %v763
        %v845 = vsub.f32 %v666, %v763
        %v846 = vsub.f32 %v556, %v766
        %v847 = vsub.f32 %v669, %v766
        %v848 = vsub.f32 %v559, %v769
        %v849 = vsub.f32 %v672, %v769
        %v850 = vsub.f32 %v562, %v772
        %v851 = vsub.f32 %v675, %v772
        %v852 = vsub.f32 %v565, %v775
        %v853 = vsub.f32 %v678, %v775
        %v854 = vsub.f32 %v568, %v778
        %v855 = vsub.f32 %v681, %v778
        %v856 = vsub.f32 %v571, %v781
        %v857 = vsub.f32 %v684, %v781
        %v858 = vsub.f32 %v574, %v784
        %v859 = vsub.f32 %v687, %v784
        %v860 = vsub.f32 %v577, %v787
        %v861 = vsub.f32 %v690, %v787
        %v862 = vsub.f32 %v580, %v790
        %v863 = vsub.f32 %v693, %v790
        %v864 = vsub.f32 %v583, %v793
        %v865 = vsub.f32 %v696, %v793
        %v866 = vsub.f32 %v586, %v796
        %v867 = vsub.f32 %v699, %v796
        %v868 = vsub.f32 %v589, %v799
        %v869 = vsub.f32 %v702, %v799
        %v870 = vsub.f32 %v592, %v802
        %v871 = vsub.f32 %v705, %v802
        %v872 = vsub.f32 %v595, %v805
        %v873 = vsub.f32 %v708, %v805
        %v874 = vsub.f32 %v598, %v808
        %v875 = vsub.f32 %v711, %v808
        %v876 = vsub.f32 %v601, %v811
        %v877 = vsub.f32 %v714, %v811
        %v878 = vsub.f32 %v604, %v814
        %v879 = vsub.f32 %v717, %v814
        %v880 = vsub.f32 %v607, %v817
        %v881 = vsub.f32 %v720, %v817
        %v882 = vmul.f32 %v818, 1.442695
        %v883 = vpow.pop %v882
        %v884 = vmul.f32 %v819, 1.442695
        %v885 = vpow.pop %v884
        %v886 = vmul.f32 %v820, 1.442695
        %v887 = vpow.pop %v886
        %v888 = vmul.f32 %v821, 1.442695
        %v889 = vpow.pop %v888
        %v890 = vmul.f32 %v822, 1.442695
        %v891 = vpow.pop %v890
        %v892 = vmul.f32 %v823, 1.442695
        %v893 = vpow.pop %v892
        %v894 = vmul.f32 %v824, 1.442695
        %v895 = vpow.pop %v894
        %v896 = vmul.f32 %v825, 1.442695
        %v897 = vpow.pop %v896
        %v898 = vmul.f32 %v826, 1.442695
        %v899 = vpow.pop %v898
        %v900 = vmul.f32 %v827, 1.442695
        %v901 = vpow.pop %v900
        %v902 = vmul.f32 %v828, 1.442695
        %v903 = vpow.pop %v902
        %v904 = vmul.f32 %v829, 1.442695
        %v905 = vpow.pop %v904
        %v906 = vmul.f32 %v830, 1.442695
        %v907 = vpow.pop %v906
        %v908 = vmul.f32 %v831, 1.442695
        %v909 = vpow.pop %v908
        %v910 = vmul.f32 %v832, 1.442695
        %v911 = vpow.pop %v910
        %v912 = vmul.f32 %v833, 1.442695
        %v913 = vpow.pop %v912
        %v914 = vmul.f32 %v834, 1.442695
        %v915 = vpow.pop %v914
        %v916 = vmul.f32 %v835, 1.442695
        %v917 = vpow.pop %v916
        %v918 = vmul.f32 %v836, 1.442695
        %v919 = vpow.pop %v918
        %v920 = vmul.f32 %v837, 1.442695
        %v921 = vpow.pop %v920
        %v922 = vmul.f32 %v838, 1.442695
        %v923 = vpow.pop %v922
        %v924 = vmul.f32 %v839, 1.442695
        %v925 = vpow.pop %v924
        %v926 = vmul.f32 %v840, 1.442695
        %v927 = vpow.pop %v926
        %v928 = vmul.f32 %v841, 1.442695
        %v929 = vpow.pop %v928
        %v930 = vmul.f32 %v842, 1.442695
        %v931 = vpow.pop %v930
        %v932 = vmul.f32 %v843, 1.442695
        %v933 = vpow.pop %v932
        %v934 = vmul.f32 %v844, 1.442695
        %v935 = vpow.pop %v934
        %v936 = vmul.f32 %v845, 1.442695
        %v937 = vpow.pop %v936
        %v938 = vmul.f32 %v846, 1.442695
        %v939 = vpow.pop %v938
        %v940 = vmul.f32 %v847, 1.442695
        %v941 = vpow.pop %v940
        %v942 = vmul.f32 %v848, 1.442695
        %v943 = vpow.pop %v942
        %v944 = vmul.f32 %v849, 1.442695
        %v945 = vpow.pop %v944
        %v946 = vmul.f32 %v850, 1.442695
        %v947 = vpow.pop %v946
        %v948 = vmul.f32 %v851, 1.442695
        %v949 = vpow.pop %v948
        %v950 = vmul.f32 %v852, 1.442695
        %v951 = vpow.pop %v950
        %v952 = vmul.f32 %v853, 1.442695
        %v953 = vpow.pop %v952
        %v954 = vmul.f32 %v854, 1.442695
        %v955 = vpow.pop %v954
        %v956 = vmul.f32 %v855, 1.442695
        %v957 = vpow.pop %v956
        %v958 = vmul.f32 %v856, 1.442695
        %v959 = vpow.pop %v958
        %v960 = vmul.f32 %v857, 1.442695
        %v961 = vpow.pop %v960
        %v962 = vmul.f32 %v858, 1.442695
        %v963 = vpow.pop %v962
        %v964 = vmul.f32 %v859, 1.442695
        %v965 = vpow.pop %v964
        %v966 = vmul.f32 %v860, 1.442695
        %v967 = vpow.pop %v966
        %v968 = vmul.f32 %v861, 1.442695
        %v969 = vpow.pop %v968
        %v970 = vmul.f32 %v862, 1.442695
        %v971 = vpow.pop %v970
        %v972 = vmul.f32 %v863, 1.442695
        %v973 = vpow.pop %v972
        %v974 = vmul.f32 %v864, 1.442695
        %v975 = vpow.pop %v974
        %v976 = vmul.f32 %v865, 1.442695
        %v977 = vpow.pop %v976
        %v978 = vmul.f32 %v866, 1.442695
        %v979 = vpow.pop %v978
        %v980 = vmul.f32 %v867, 1.442695
        %v981 = vpow.pop %v980
        %v982 = vmul.f32 %v868, 1.442695
        %v983 = vpow.pop %v982
        %v984 = vmul.f32 %v869, 1.442695
        %v985 = vpow.pop %v984
        %v986 = vmul.f32 %v870, 1.442695
        %v987 = vpow.pop %v986
        %v988 = vmul.f32 %v871, 1.442695
        %v989 = vpow.pop %v988
        %v990 = vmul.f32 %v872, 1.442695
        %v991 = vpow.pop %v990
        %v992 = vmul.f32 %v873, 1.442695
        %v993 = vpow.pop %v992
        %v994 = vmul.f32 %v874, 1.442695
        %v995 = vpow.pop %v994
        %v996 = vmul.f32 %v875, 1.442695
        %v997 = vpow.pop %v996
        %v998 = vmul.f32 %v876, 1.442695
        %v999 = vpow.pop %v998
        %v1000 = vmul.f32 %v877, 1.442695
        %v1001 = vpow.pop %v1000
        %v1002 = vmul.f32 %v878, 1.442695
        %v1003 = vpow.pop %v1002
        %v1004 = vmul.f32 %v879, 1.442695
        %v1005 = vpow.pop %v1004
        %v1006 = vmul.f32 %v880, 1.442695
        %v1007 = vpow.pop %v1006
        %v1008 = vmul.f32 %v881, 1.442695
        %v1009 = vpow.pop %v1008
        %v1010 = vadd.f32 %v883, %v885
        %1011 = vadd.xlane.f32.xlu0 %v1010
        %v1012 = vpop.xlane.xlu0 %1011
        %v1013 = vadd.f32 %v887, %v889
        %1014 = vadd.xlane.f32.xlu0 %v1013
        %v1015 = vpop.xlane.xlu0 %1014
        %v1016 = vadd.f32 %v891, %v893
        %1017 = vadd.xlane.f32.xlu0 %v1016
        %v1018 = vpop.xlane.xlu0 %1017
        %v1019 = vadd.f32 %v895, %v897
        %1020 = vadd.xlane.f32.xlu0 %v1019
        %v1021 = vpop.xlane.xlu0 %1020
        %v1022 = vadd.f32 %v899, %v901
        %1023 = vadd.xlane.f32.xlu0 %v1022
        %v1024 = vpop.xlane.xlu0 %1023
        %v1025 = vadd.f32 %v903, %v905
        %1026 = vadd.xlane.f32.xlu0 %v1025
        %v1027 = vpop.xlane.xlu0 %1026
        %v1028 = vadd.f32 %v907, %v909
        %1029 = vadd.xlane.f32.xlu0 %v1028
        %v1030 = vpop.xlane.xlu0 %1029
        %v1031 = vadd.f32 %v911, %v913
        %1032 = vadd.xlane.f32.xlu0 %v1031
        %v1033 = vpop.xlane.xlu0 %1032
        %v1034 = vadd.f32 %v915, %v917
        %1035 = vadd.xlane.f32.xlu0 %v1034
        %v1036 = vpop.xlane.xlu0 %1035
        %v1037 = vadd.f32 %v919, %v921
        %1038 = vadd.xlane.f32.xlu0 %v1037
        %v1039 = vpop.xlane.xlu0 %1038
        %v1040 = vadd.f32 %v923, %v925
        %1041 = vadd.xlane.f32.xlu0 %v1040
        %v1042 = vpop.xlane.xlu0 %1041
        %v1043 = vadd.f32 %v927, %v929
        %1044 = vadd.xlane.f32.xlu0 %v1043
        %v1045 = vpop.xlane.xlu0 %1044
        %v1046 = vadd.f32 %v931, %v933
        %1047 = vadd.xlane.f32.xlu0 %v1046
        %v1048 = vpop.xlane.xlu0 %1047
        %v1049 = vadd.f32 %v935, %v937
        %1050 = vadd.xlane.f32.xlu0 %v1049
        %v1051 = vpop.xlane.xlu0 %1050
        %v1052 = vadd.f32 %v939, %v941
        %1053 = vadd.xlane.f32.xlu0 %v1052
        %v1054 = vpop.xlane.xlu0 %1053
        %v1055 = vadd.f32 %v943, %v945
        %1056 = vadd.xlane.f32.xlu0 %v1055
        %v1057 = vpop.xlane.xlu0 %1056
        %v1058 = vadd.f32 %v947, %v949
        %1059 = vadd.xlane.f32.xlu0 %v1058
        %v1060 = vpop.xlane.xlu0 %1059
        %v1061 = vadd.f32 %v951, %v953
        %1062 = vadd.xlane.f32.xlu0 %v1061
        %v1063 = vpop.xlane.xlu0 %1062
        %v1064 = vadd.f32 %v955, %v957
        %1065 = vadd.xlane.f32.xlu0 %v1064
        %v1066 = vpop.xlane.xlu0 %1065
        %v1067 = vadd.f32 %v959, %v961
        %1068 = vadd.xlane.f32.xlu0 %v1067
        %v1069 = vpop.xlane.xlu0 %1068
        %v1070 = vadd.f32 %v963, %v965
        %1071 = vadd.xlane.f32.xlu0 %v1070
        %v1072 = vpop.xlane.xlu0 %1071
        %v1073 = vadd.f32 %v967, %v969
        %1074 = vadd.xlane.f32.xlu0 %v1073
        %v1075 = vpop.xlane.xlu0 %1074
        %v1076 = vadd.f32 %v971, %v973
        %1077 = vadd.xlane.f32.xlu0 %v1076
        %v1078 = vpop.xlane.xlu0 %1077
        %v1079 = vadd.f32 %v975, %v977
        %1080 = vadd.xlane.f32.xlu0 %v1079
        %v1081 = vpop.xlane.xlu0 %1080
        %v1082 = vadd.f32 %v979, %v981
        %1083 = vadd.xlane.f32.xlu0 %v1082
        %v1084 = vpop.xlane.xlu0 %1083
        %v1085 = vadd.f32 %v983, %v985
        %1086 = vadd.xlane.f32.xlu0 %v1085
        %v1087 = vpop.xlane.xlu0 %1086
        %v1088 = vadd.f32 %v987, %v989
        %1089 = vadd.xlane.f32.xlu0 %v1088
        %v1090 = vpop.xlane.xlu0 %1089
        %v1091 = vadd.f32 %v991, %v993
        %1092 = vadd.xlane.f32.xlu0 %v1091
        %v1093 = vpop.xlane.xlu0 %1092
        %v1094 = vadd.f32 %v995, %v997
        %1095 = vadd.xlane.f32.xlu0 %v1094
        %v1096 = vpop.xlane.xlu0 %1095
        %v1097 = vadd.f32 %v999, %v1001
        %1098 = vadd.xlane.f32.xlu0 %v1097
        %v1099 = vpop.xlane.xlu0 %1098
        %v1100 = vadd.f32 %v1003, %v1005
        %1101 = vadd.xlane.f32.xlu0 %v1100
        %v1102 = vpop.xlane.xlu0 %1101
        %v1103 = vadd.f32 %v1007, %v1009
        %1104 = vadd.xlane.f32.xlu0 %v1103
        %v1105 = vpop.xlane.xlu0 %1104
        %v1106 = vrcp.pop %v1012
        %v1107 = vrcp.pop %v1015
        %v1108 = vrcp.pop %v1018
        %v1109 = vrcp.pop %v1021
        %v1110 = vrcp.pop %v1024
        %v1111 = vrcp.pop %v1027
        %v1112 = vrcp.pop %v1030
        %v1113 = vrcp.pop %v1033
        %v1114 = vrcp.pop %v1036
        %v1115 = vrcp.pop %v1039
        %v1116 = vrcp.pop %v1042
        %v1117 = vrcp.pop %v1045
        %v1118 = vrcp.pop %v1048
        %v1119 = vrcp.pop %v1051
        %v1120 = vrcp.pop %v1054
        %v1121 = vrcp.pop %v1057
        %v1122 = vrcp.pop %v1060
        %v1123 = vrcp.pop %v1063
        %v1124 = vrcp.pop %v1066
        %v1125 = vrcp.pop %v1069
        %v1126 = vrcp.pop %v1072
        %v1127 = vrcp.pop %v1075
        %v1128 = vrcp.pop %v1078
        %v1129 = vrcp.pop %v1081
        %v1130 = vrcp.pop %v1084
        %v1131 = vrcp.pop %v1087
        %v1132 = vrcp.pop %v1090
        %v1133 = vrcp.pop %v1093
        %v1134 = vrcp.pop %v1096
        %v1135 = vrcp.pop %v1099
        %v1136 = vrcp.pop %v1102
        %v1137 = vrcp.pop %v1105
        %v1138 = vmul.f32 %v1012, %v1106
        %v1139 = vmul.f32 %v1015, %v1107
        %v1140 = vmul.f32 %v1018, %v1108
        %v1141 = vmul.f32 %v1021, %v1109
        %v1142 = vmul.f32 %v1024, %v1110
        %v1143 = vmul.f32 %v1027, %v1111
        %v1144 = vmul.f32 %v1030, %v1112
        %v1145 = vmul.f32 %v1033, %v1113
        %v1146 = vmul.f32 %v1036, %v1114
        %v1147 = vmul.f32 %v1039, %v1115
        %v1148 = vmul.f32 %v1042, %v1116
        %v1149 = vmul.f32 %v1045, %v1117
        %v1150 = vmul.f32 %v1048, %v1118
        %v1151 = vmul.f32 %v1051, %v1119
        %v1152 = vmul.f32 %v1054, %v1120
        %v1153 = vmul.f32 %v1057, %v1121
        %v1154 = vmul.f32 %v1060, %v1122
        %v1155 = vmul.f32 %v1063, %v1123
        %v1156 = vmul.f32 %v1066, %v1124
        %v1157 = vmul.f32 %v1069, %v1125
        %v1158 = vmul.f32 %v1072, %v1126
        %v1159 = vmul.f32 %v1075, %v1127
        %v1160 = vmul.f32 %v1078, %v1128
        %v1161 = vmul.f32 %v1081, %v1129
        %v1162 = vmul.f32 %v1084, %v1130
        %v1163 = vmul.f32 %v1087, %v1131
        %v1164 = vmul.f32 %v1090, %v1132
        %v1165 = vmul.f32 %v1093, %v1133
        %v1166 = vmul.f32 %v1096, %v1134
        %v1167 = vmul.f32 %v1099, %v1135
        %v1168 = vmul.f32 %v1102, %v1136
        %v1169 = vmul.f32 %v1105, %v1137
        %v1170 = vsub.f32 2.0, %v1138
        %v1171 = vsub.f32 2.0, %v1139
        %v1172 = vsub.f32 2.0, %v1140
        %v1173 = vsub.f32 2.0, %v1141
        %v1174 = vsub.f32 2.0, %v1142
        %v1175 = vsub.f32 2.0, %v1143
        %v1176 = vsub.f32 2.0, %v1144
        %v1177 = vsub.f32 2.0, %v1145
        %v1178 = vsub.f32 2.0, %v1146
        %v1179 = vsub.f32 2.0, %v1147
        %v1180 = vsub.f32 2.0, %v1148
        %v1181 = vsub.f32 2.0, %v1149
        %v1182 = vsub.f32 2.0, %v1150
        %v1183 = vsub.f32 2.0, %v1151
        %v1184 = vsub.f32 2.0, %v1152
        %v1185 = vsub.f32 2.0, %v1153
        %v1186 = vsub.f32 2.0, %v1154
        %v1187 = vsub.f32 2.0, %v1155
        %v1188 = vsub.f32 2.0, %v1156
        %v1189 = vsub.f32 2.0, %v1157
        %v1190 = vsub.f32 2.0, %v1158
        %v1191 = vsub.f32 2.0, %v1159
        %v1192 = vsub.f32 2.0, %v1160
        %v1193 = vsub.f32 2.0, %v1161
        %v1194 = vsub.f32 2.0, %v1162
        %v1195 = vsub.f32 2.0, %v1163
        %v1196 = vsub.f32 2.0, %v1164
        %v1197 = vsub.f32 2.0, %v1165
        %v1198 = vsub.f32 2.0, %v1166
        %v1199 = vsub.f32 2.0, %v1167
        %v1200 = vsub.f32 2.0, %v1168
        %v1201 = vsub.f32 2.0, %v1169
        %v1202 = vmul.f32 %v1106, %v1170
        %v1203 = vmul.f32 %v1107, %v1171
        %v1204 = vmul.f32 %v1108, %v1172
        %v1205 = vmul.f32 %v1109, %v1173
        %v1206 = vmul.f32 %v1110, %v1174
        %v1207 = vmul.f32 %v1111, %v1175
        %v1208 = vmul.f32 %v1112, %v1176
        %v1209 = vmul.f32 %v1113, %v1177
        %v1210 = vmul.f32 %v1114, %v1178
        %v1211 = vmul.f32 %v1115, %v1179
        %v1212 = vmul.f32 %v1116, %v1180
        %v1213 = vmul.f32 %v1117, %v1181
        %v1214 = vmul.f32 %v1118, %v1182
        %v1215 = vmul.f32 %v1119, %v1183
        %v1216 = vmul.f32 %v1120, %v1184
        %v1217 = vmul.f32 %v1121, %v1185
        %v1218 = vmul.f32 %v1122, %v1186
        %v1219 = vmul.f32 %v1123, %v1187
        %v1220 = vmul.f32 %v1124, %v1188
        %v1221 = vmul.f32 %v1125, %v1189
        %v1222 = vmul.f32 %v1126, %v1190
        %v1223 = vmul.f32 %v1127, %v1191
        %v1224 = vmul.f32 %v1128, %v1192
        %v1225 = vmul.f32 %v1129, %v1193
        %v1226 = vmul.f32 %v1130, %v1194
        %v1227 = vmul.f32 %v1131, %v1195
        %v1228 = vmul.f32 %v1132, %v1196
        %v1229 = vmul.f32 %v1133, %v1197
        %v1230 = vmul.f32 %v1134, %v1198
        %v1231 = vmul.f32 %v1135, %v1199
        %v1232 = vmul.f32 %v1136, %v1200
        %v1233 = vmul.f32 %v1137, %v1201
        %v1234 = vmul.f32 %v883, %v1202
        %v1235 = vmul.f32 %v885, %v1202
        %v1236 = vmul.f32 %v887, %v1203
        %v1237 = vmul.f32 %v889, %v1203
        %v1238 = vmul.f32 %v891, %v1204
        %v1239 = vmul.f32 %v893, %v1204
        %v1240 = vmul.f32 %v895, %v1205
        %v1241 = vmul.f32 %v897, %v1205
        %v1242 = vmul.f32 %v899, %v1206
        %v1243 = vmul.f32 %v901, %v1206
        %v1244 = vmul.f32 %v903, %v1207
        %v1245 = vmul.f32 %v905, %v1207
        %v1246 = vmul.f32 %v907, %v1208
        %v1247 = vmul.f32 %v909, %v1208
        %v1248 = vmul.f32 %v911, %v1209
        %v1249 = vmul.f32 %v913, %v1209
        %v1250 = vmul.f32 %v915, %v1210
        %v1251 = vmul.f32 %v917, %v1210
        %v1252 = vmul.f32 %v919, %v1211
        %v1253 = vmul.f32 %v921, %v1211
        %v1254 = vmul.f32 %v923, %v1212
        %v1255 = vmul.f32 %v925, %v1212
        %v1256 = vmul.f32 %v927, %v1213
        %v1257 = vmul.f32 %v929, %v1213
        %v1258 = vmul.f32 %v931, %v1214
        %v1259 = vmul.f32 %v933, %v1214
        %v1260 = vmul.f32 %v935, %v1215
        %v1261 = vmul.f32 %v937, %v1215
        %v1262 = vmul.f32 %v939, %v1216
        %v1263 = vmul.f32 %v941, %v1216
        %v1264 = vmul.f32 %v943, %v1217
        %v1265 = vmul.f32 %v945, %v1217
        %v1266 = vmul.f32 %v947, %v1218
        %v1267 = vmul.f32 %v949, %v1218
        %v1268 = vmul.f32 %v951, %v1219
        %v1269 = vmul.f32 %v953, %v1219
        %v1270 = vmul.f32 %v955, %v1220
        %v1271 = vmul.f32 %v957, %v1220
        %v1272 = vmul.f32 %v959, %v1221
        %v1273 = vmul.f32 %v961, %v1221
        %v1274 = vmul.f32 %v963, %v1222
        %v1275 = vmul.f32 %v965, %v1222
        %v1276 = vmul.f32 %v967, %v1223
        %v1277 = vmul.f32 %v969, %v1223
        %v1278 = vmul.f32 %v971, %v1224
        %v1279 = vmul.f32 %v973, %v1224
        %v1280 = vmul.f32 %v975, %v1225
        %v1281 = vmul.f32 %v977, %v1225
        %v1282 = vmul.f32 %v979, %v1226
        %v1283 = vmul.f32 %v981, %v1226
        %v1284 = vmul.f32 %v983, %v1227
        %v1285 = vmul.f32 %v985, %v1227
        %v1286 = vmul.f32 %v987, %v1228
        %v1287 = vmul.f32 %v989, %v1228
        %v1288 = vmul.f32 %v991, %v1229
        %v1289 = vmul.f32 %v993, %v1229
        %v1290 = vmul.f32 %v995, %v1230
        %v1291 = vmul.f32 %v997, %v1230
        %v1292 = vmul.f32 %v999, %v1231
        %v1293 = vmul.f32 %v1001, %v1231
        %v1294 = vmul.f32 %v1003, %v1232
        %v1295 = vmul.f32 %v1005, %v1232
        %v1296 = vmul.f32 %v1007, %v1233
        %v1297 = vmul.f32 %v1009, %v1233
        %v1298 = vld [vmem:[%s219] sm:$0xff]
        %v1299 = vld [vmem:[%s219 + $0x8] sm:$0xff]
        %1300 = vmatpush.msra.mxu0 %v1264
        %1301 = vmatpush.msra.mxu0 %v1262
        %1302 = vmatpush.msra.mxu0 %v1260
        %1303 = vmatpush.msra.mxu0 %v1258
        %1304 = vmatpush.msra.mxu0 %v1256
        %1305 = vmatpush.msra.mxu0 %v1254
        %1306 = vmatpush.msra.mxu0 %v1252
        %1307 = vmatpush.msra.mxu0 %v1250
        %1308 = vmatpush.msra.mxu0 %v1248
        %1309 = vmatpush.msra.mxu0 %v1246
        %1310 = vmatpush.msra.mxu0 %v1244
        %1311 = vmatpush.msra.mxu0 %v1242
        %1312 = vmatpush.msra.mxu0 %v1240
        %1313 = vmatpush.msra.mxu0 %v1238
        %1314 = vmatpush.msra.mxu0 %v1236
        %1315 = vmatpush.msra.mxu0 %v1234
        %1316 = vmatmul.f32.gmra.mxu0 %v309
        %v1317 = vpop.f32.mrf.mxu0
        %v1318 = vadd.f32 0.0, %v1317
        %1319 = vdwg.mxu0
        %1320 = vmatpush.msra.mxu0 %v1296
        %1321 = vmatpush.msra.mxu0 %v1294
        %1322 = vmatpush.msra.mxu0 %v1292
        %1323 = vmatpush.msra.mxu0 %v1290
        %1324 = vmatpush.msra.mxu0 %v1288
        %1325 = vmatpush.msra.mxu0 %v1286
        %1326 = vmatpush.msra.mxu0 %v1284
        %1327 = vmatpush.msra.mxu0 %v1282
        %1328 = vmatpush.msra.mxu0 %v1280
        %1329 = vmatpush.msra.mxu0 %v1278
        %1330 = vmatpush.msra.mxu0 %v1276
        %1331 = vmatpush.msra.mxu0 %v1274
        %1332 = vmatpush.msra.mxu0 %v1272
        %1333 = vmatpush.msra.mxu0 %v1270
        %1334 = vmatpush.msra.mxu0 %v1268
        %1335 = vmatpush.msra.mxu0 %v1266
        %1336 = vmatmul.f32.gmra.mxu0 %v332
        %v1337 = vpop.f32.mrf.mxu0
        %v1338 = vadd.f32 %v1318, %v1337
        %1339 = vdwg.mxu0
        %1340 = vmatpush.msra.mxu0 %v1265
        %1341 = vmatpush.msra.mxu0 %v1263
        %1342 = vmatpush.msra.mxu0 %v1261
        %1343 = vmatpush.msra.mxu0 %v1259
        %1344 = vmatpush.msra.mxu0 %v1257
        %1345 = vmatpush.msra.mxu0 %v1255
        %1346 = vmatpush.msra.mxu0 %v1253
        %1347 = vmatpush.msra.mxu0 %v1251
        %1348 = vmatpush.msra.mxu0 %v1249
        %1349 = vmatpush.msra.mxu0 %v1247
        %1350 = vmatpush.msra.mxu0 %v1245
        %1351 = vmatpush.msra.mxu0 %v1243
        %1352 = vmatpush.msra.mxu0 %v1241
        %1353 = vmatpush.msra.mxu0 %v1239
        %1354 = vmatpush.msra.mxu0 %v1237
        %1355 = vmatpush.msra.mxu0 %v1235
        %1356 = vmatmul.f32.gmra.mxu0 %v309
        %v1357 = vpop.f32.mrf.mxu0
        %v1358 = vadd.f32 0.0, %v1357
        %1359 = vdwg.mxu0
        %1360 = vmatpush.msra.mxu0 %v1297
        %1361 = vmatpush.msra.mxu0 %v1295
        %1362 = vmatpush.msra.mxu0 %v1293
        %1363 = vmatpush.msra.mxu0 %v1291
        %1364 = vmatpush.msra.mxu0 %v1289
        %1365 = vmatpush.msra.mxu0 %v1287
        %1366 = vmatpush.msra.mxu0 %v1285
        %1367 = vmatpush.msra.mxu0 %v1283
        %1368 = vmatpush.msra.mxu0 %v1281
        %1369 = vmatpush.msra.mxu0 %v1279
        %1370 = vmatpush.msra.mxu0 %v1277
        %1371 = vmatpush.msra.mxu0 %v1275
        %1372 = vmatpush.msra.mxu0 %v1273
        %1373 = vmatpush.msra.mxu0 %v1271
        %1374 = vmatpush.msra.mxu0 %v1269
        %1375 = vmatpush.msra.mxu0 %v1267
        %1376 = vmatmul.f32.gmra.mxu0 %v332
        %v1377 = vpop.f32.mrf.mxu0
        %v1378 = vadd.f32 %v1358, %v1377
        %1379 = vdwg.mxu0
        %v1380 = vadd.f32 %v1298, %v1338
        %v1381 = vadd.f32 %v1299, %v1378
        %1382 = vst [vmem:[%s219] sm:$0xff] %v1380
        %1383 = vst [vmem:[%s219 + $0x8] sm:$0xff] %v1381
        %s1384 = sand.u32 %s137, 1
        %s1385 = scalar_lea.sflag [#allocation5], %s1384
        %s1386 = sand.u32 %s137, 1
        %s1387 = smul.addr %s1386, 16
        %s1388 = scalar_lea.vmem [#allocation6], %s1387
        // Predicated region
        $region45: #{tpu_custom_call.1} parent=35 // pred_check
          %p1389 = pneg %p147
        $region46: #{tpu_custom_call.1} parent=35 // pred_check_branch
          %1391 = sbr.rel (%p1389) target = $region48
        $region47: #{tpu_custom_call.1} parent=35 // pred_region
          %1393 = vsyncadd %s1385, 0
          %s1394 = smul.addr %s25, 2
          %s1395 = smul.addr %s24, 4
          %s1396 = sadd.s32 %s1394, %s1395
          %s1397 = smul.addr %s1396, 8
          %s1398 = scalar_lea.hbm %s4, %s1397
          %s1400 = sshll.u32 %s1388, 4
          %s1401 = int_to_ptr.vmem [resolvable:$true] %s1400
          %s1402 = sshll.u32 %s1398, 4
          %s1403 = int_to_ptr.hbm [resolvable:$true] %s1402
          %1405 = dma.vmem_to_hbm [thread:$0]  %s1401, 256, %s1403, %s1385
        $region48: #{tpu_custom_call.1} parent=35 // pred_fallthru
          _
      $region36: #{tpu_custom_call.1} parent=5 // pred_fallthru
        _
      %p1406 = scmp.le.s32.totalorder 2, %s14
      // Predicated region
      $region49: #{tpu_custom_call.1} parent=5 // pred_check
        %p1407 = pneg %p1406
      $region50: #{tpu_custom_call.1} parent=5 // pred_check_branch
        %1409 = sbr.rel (%p1407) target = $region52
      $region51: #{tpu_custom_call.1} parent=5 // pred_region
        %s1410 = ssub.s32 %s14, 2
        // Predicated region
        $region53: #{tpu_custom_call.1} parent=51 // pred_check
          %p1411 = pneg %p153
        $region54: #{tpu_custom_call.1} parent=51 // pred_check_branch
          %1413 = sbr.rel (%p1411) target = $region56
        $region55: #{tpu_custom_call.1} parent=51 // pred_region
          %s1414 = sand.u32 %s138, 1
          %s1415 = scalar_lea.sflag [#allocation5], %s1414
          %s1416 = sand.u32 %s138, 1
          %s1417 = smul.addr %s1416, 16
          %s1418 = scalar_lea.vmem [#allocation6], %s1417
          %1420 = dma.done %s1415, 256
        $region56: #{tpu_custom_call.1} parent=51 // pred_fallthru
          _
      $region52: #{tpu_custom_call.1} parent=5 // pred_fallthru
        _
    $region6: #{tpu_custom_call.1} parent=1 // loop_footer
      %s18 = sadd.s32 1, %s14
    $region7: #{tpu_custom_call.1} parent=1 // loop_footer_branch
      %13 = sbr.rel target = $region3
    $region8: #{tpu_custom_call.1} parent=1 // loop_exit
      _
    %1421 = vsyncpa [#allocation4], 1
    %s1422 = scalar_lea.sflag [#allocation4], 1
    %1423 = vsyncpa %s1422, 1
    %1424 = vsyncpa [#allocation5], 1
    %s1425 = scalar_lea.sflag [#allocation5], 1
    %1426 = vsyncpa %s1425, 1

// kernel: tpu_custom_call.1
$region0: #{tpu_custom_call.1}
  #allocation0 [shape = 'u32[]', space=smem, size = 0x4, offset = 0x4, fixed_abs, tag = 'smem constant byte address 0x4 - core index']
  #allocation1 [shape = 'u32[72,128]{1,0:T(1,128)}', space=vmem, size = 0x9000, scoped, tag = 'internal scratch']
  #allocation2 [shape = 'f32[8,256]{1,0:T(8,128)}', space=vmem, size = 0x2000, scoped, tag = 'scratch operand']
  %s0 = inlined_call_operand.hbm [shape: f32[2,8,256], index: 0, kind: input, shape index: {}]
  %s1 = inlined_call_operand.vmem [shape: f32[8,256], index: 1, kind: input, shape index: {}]
  %s2 = inlined_call_operand.vmem [shape: f32[8,8], index: 2, kind: input, shape index: {}]
  %s3 = inlined_call_operand.vmem [shape: f32[16,8], index: 3, kind: input, shape index: {}]
  %s4 = inlined_call_operand.hbm [shape: f32[1,2,8,256], index: 4, kind: output, shape index: {}]
  %s5 = sld [smem:[#allocation0]]
  $region57: #{tpu_custom_call.1} parent=0
    _
  %s7 = ssub.s32 1, %s5
  %s8 = scalar_select 0, %s7, %s5
  $region1: #{tpu_custom_call.1} parent=0
    #allocation3 [shape = 'u8[16384]{0}', space=vmem, size = 0x4000, scoped, tag = 'input window, operand 0']
    #allocation4 [shape = 's32[2]{0}', space=sflag, size = 0x8, scoped, tag = 'scoped memory for tpu_custom_call.1']
    #allocation5 [shape = 's32[2]{0}', space=sflag, size = 0x8, scoped, tag = 'scoped memory for tpu_custom_call.1']
    #allocation6 [shape = 'u8[16384]{0}', space=vmem, size = 0x4000, scoped, tag = 'output window, operand 0']
    %9 = vsyncpa [#allocation4], 0
    %s10 = scalar_lea.sflag [#allocation4], 1
    %11 = vsyncpa %s10, 0
    %12 = vsyncpa [#allocation5], 0
    %s13 = scalar_lea.sflag [#allocation5], 1
    %14 = vsyncpa %s13, 0
    loop: start=0, step=1, limit=4
    $region2: #{tpu_custom_call.1} parent=1 // loop_pre_header
      _
    $region3: #{tpu_custom_call.1} parent=1 // loop_header
      %s16 = sphi 0, %s20
      %p17 = scmp.ge.s32.totalorder %s16, 4
      %s23 = sphi 0, %s42
      %s24 = sphi 0, %s38
      %s25 = sphi 0, %s34
      %s26 = sphi 0, %s23
      %s27 = sphi 0, %s24
      %s28 = sphi 0, %s25
      %s29 = sphi 0, %s26
      %s30 = sphi 0, %s27
      %s31 = sphi 0, %s28
      %s45 = sphi 0, %s47
      %s48 = sphi 0, %s45
      %s49 = sphi 0, %s48
      %s65 = sphi 0, %s49
      %s69 = sphi 0, %s69
      %s71 = sphi 0, %s69
      %s72 = sphi 0, %s71
      %s86 = sphi 0, %s72
      %s90 = sphi 0, %s90
      %s92 = sphi 0, %s90
      %s93 = sphi 0, %s92
      %s107 = sphi 0, %s93
      %s111 = sphi 0, %s111
      %s113 = sphi 0, %s111
      %s114 = sphi 0, %s113
      %s128 = sphi 0, %s114
      %s136 = sphi 0, %s138
      %s139 = sphi 0, %s136
      %s140 = sphi 0, %s139
      %s156 = sphi 0, %s140
    $region4: #{tpu_custom_call.1} parent=1 // loop_header_branch
      %19 = sbr.rel (%p17) target = $region8
    $region5: #{tpu_custom_call.1} parent=1 // loop_body
      %s21 = ssub.s32 %s16, 1
      %s22 = ssub.s32 %s16, 2
      %s32 = sadd.s32 1, %s25
      %p33 = scmp.ge.s32.totalorder %s32, 1
      %s34 = scalar_select %p33, 0, %s32
      %s35 = sadd.s32 1, %s24
      %s36 = scalar_select %p33, %s35, %s24
      %p37 = scmp.ge.s32.totalorder %s36, 2
      %s38 = scalar_select %p37, 0, %s36
      %s39 = sadd.s32 1, %s23
      %s40 = scalar_select %p37, %s39, %s23
      %p41 = scmp.ge.s32.totalorder %s40, 1
      %s42 = scalar_select %p41, 0, %s40
      %s43 = ssub.s32 %s24, %s38
      %p44 = scmp.eq.s32.totalorder %s43, 0
      %s46 = sadd.s32 %s45, 1
      %s47 = scalar_select %p44, %s45, %s46
      %p50 = pneg %p44
      %p51 = scmp.eq.s32.totalorder %s16, 1
      %p52 = por %p50, %p51
      %p53 = scmp.ne.s32.totalorder %s45, %s48
      %p54 = scmp.eq.s32.totalorder %s16, 0
      %p55 = por %p53, %p54
      %p56 = scmp.ne.s32.totalorder %s45, %s48
      %p57 = scmp.eq.s32.totalorder %s21, 1
      %p58 = por %p56, %p57
      %p59 = scmp.ne.s32.totalorder %s48, %s49
      %p60 = scmp.eq.s32.totalorder %s21, 0
      %p61 = por %p59, %p60
      %p62 = scmp.ne.s32.totalorder %s48, %s49
      %p63 = scmp.eq.s32.totalorder %s22, 1
      %p64 = por %p62, %p63
      %p66 = scmp.ne.s32.totalorder %s49, %s65
      %p67 = scmp.eq.s32.totalorder %s22, 0
      %p68 = por %p66, %p67
      %s70 = sadd.s32 %s69, 1
      %p73 = scmp.eq.s32.totalorder %s16, 1
      %p74 = scmp.ne.s32.totalorder %s69, %s71
      %p75 = scmp.eq.s32.totalorder %s16, 0
      %p76 = por %p74, %p75
      %p77 = scmp.ne.s32.totalorder %s69, %s71
      %p78 = scmp.eq.s32.totalorder %s21, 1
      %p79 = por %p77, %p78
      %p80 = scmp.ne.s32.totalorder %s71, %s72
      %p81 = scmp.eq.s32.totalorder %s21, 0
      %p82 = por %p80, %p81
      %p83 = scmp.ne.s32.totalorder %s71, %s72
      %p84 = scmp.eq.s32.totalorder %s22, 1
      %p85 = por %p83, %p84
      %p87 = scmp.ne.s32.totalorder %s72, %s86
      %p88 = scmp.eq.s32.totalorder %s22, 0
      %p89 = por %p87, %p88
      %s91 = sadd.s32 %s90, 1
      %p94 = scmp.eq.s32.totalorder %s16, 1
      %p95 = scmp.ne.s32.totalorder %s90, %s92
      %p96 = scmp.eq.s32.totalorder %s16, 0
      %p97 = por %p95, %p96
      %p98 = scmp.ne.s32.totalorder %s90, %s92
      %p99 = scmp.eq.s32.totalorder %s21, 1
      %p100 = por %p98, %p99
      %p101 = scmp.ne.s32.totalorder %s92, %s93
      %p102 = scmp.eq.s32.totalorder %s21, 0
      %p103 = por %p101, %p102
      %p104 = scmp.ne.s32.totalorder %s92, %s93
      %p105 = scmp.eq.s32.totalorder %s22, 1
      %p106 = por %p104, %p105
      %p108 = scmp.ne.s32.totalorder %s93, %s107
      %p109 = scmp.eq.s32.totalorder %s22, 0
      %p110 = por %p108, %p109
      %s112 = sadd.s32 %s111, 1
      %p115 = scmp.eq.s32.totalorder %s16, 1
      %p116 = scmp.ne.s32.totalorder %s111, %s113
      %p117 = scmp.eq.s32.totalorder %s16, 0
      %p118 = por %p116, %p117
      %p119 = scmp.ne.s32.totalorder %s111, %s113
      %p120 = scmp.eq.s32.totalorder %s21, 1
      %p121 = por %p119, %p120
      %p122 = scmp.ne.s32.totalorder %s113, %s114
      %p123 = scmp.eq.s32.totalorder %s21, 0
      %p124 = por %p122, %p123
      %p125 = scmp.ne.s32.totalorder %s113, %s114
      %p126 = scmp.eq.s32.totalorder %s22, 1
      %p127 = por %p125, %p126
      %p129 = scmp.ne.s32.totalorder %s114, %s128
      %p130 = scmp.eq.s32.totalorder %s22, 0
      %p131 = por %p129, %p130
      %s132 = ssub.s32 %s23, %s42
      %s133 = ssub.s32 %s24, %s38
      %s134 = sor.u32 %s132, %s133
      %p135 = scmp.eq.s32.totalorder %s134, 0
      %s137 = sadd.s32 %s136, 1
      %s138 = scalar_select %p135, %s136, %s137
      %p141 = pneg %p135
      %p142 = scmp.eq.s32.totalorder %s16, 1
      %p143 = por %p141, %p142
      %p144 = scmp.ne.s32.totalorder %s136, %s139
      %p145 = scmp.eq.s32.totalorder %s16, 0
      %p146 = por %p144, %p145
      %p147 = scmp.ne.s32.totalorder %s136, %s139
      %p148 = scmp.eq.s32.totalorder %s21, 1
      %p149 = por %p147, %p148
      %p150 = scmp.ne.s32.totalorder %s139, %s140
      %p151 = scmp.eq.s32.totalorder %s21, 0
      %p152 = por %p150, %p151
      %p153 = scmp.ne.s32.totalorder %s139, %s140
      %p154 = scmp.eq.s32.totalorder %s22, 1
      %p155 = por %p153, %p154
      %p157 = scmp.ne.s32.totalorder %s140, %s156
      %p158 = scmp.eq.s32.totalorder %s22, 0
      %p159 = por %p157, %p158
      %p160 = scmp.le.s32.totalorder 1, %s16
      %p161 = scmp.lt.s32.totalorder %s16, 3
      %p162 = pnand %p160, %p161
      %p163 = pneg %p162
      // Predicated region
      $region9: #{tpu_custom_call.1} parent=5 // pred_check
        _
      $region10: #{tpu_custom_call.1} parent=5 // pred_check_branch
        %165 = sbr.rel (%p162) target = $region12
      $region11: #{tpu_custom_call.1} parent=5 // pred_region
        %s166 = ssub.s32 %s16, 1
        // Predicated region
        $region13: #{tpu_custom_call.1} parent=11 // pred_check
          %p167 = pneg %p82
        $region14: #{tpu_custom_call.1} parent=11 // pred_check_branch
          %169 = sbr.rel (%p167) target = $region16
        $region15: #{tpu_custom_call.1} parent=11 // pred_region
          _
        $region16: #{tpu_custom_call.1} parent=11 // pred_fallthru
          _
        // Predicated region
        $region17: #{tpu_custom_call.1} parent=11 // pred_check
          %p170 = pneg %p103
        $region18: #{tpu_custom_call.1} parent=11 // pred_check_branch
          %172 = sbr.rel (%p170) target = $region20
        $region19: #{tpu_custom_call.1} parent=11 // pred_region
          _
        $region20: #{tpu_custom_call.1} parent=11 // pred_fallthru
          _
        // Predicated region
        $region21: #{tpu_custom_call.1} parent=11 // pred_check
          %p173 = pneg %p124
        $region22: #{tpu_custom_call.1} parent=11 // pred_check_branch
          %175 = sbr.rel (%p173) target = $region24
        $region23: #{tpu_custom_call.1} parent=11 // pred_region
          _
        $region24: #{tpu_custom_call.1} parent=11 // pred_fallthru
          _
      $region12: #{tpu_custom_call.1} parent=5 // pred_fallthru
        _
      %p176 = scmp.lt.s32.totalorder %s16, 2
      // Predicated region
      $region25: #{tpu_custom_call.1} parent=5 // pred_check
        %p177 = pneg %p176
      $region26: #{tpu_custom_call.1} parent=5 // pred_check_branch
        %179 = sbr.rel (%p177) target = $region28
      $region27: #{tpu_custom_call.1} parent=5 // pred_region
        // Predicated region
        $region29: #{tpu_custom_call.1} parent=27 // pred_check
          %p180 = pneg %p55
        $region30: #{tpu_custom_call.1} parent=27 // pred_check_branch
          %182 = sbr.rel (%p180) target = $region32
        $region31: #{tpu_custom_call.1} parent=27 // pred_region
          %s183 = sand.u32 %s45, 1
          %s184 = scalar_lea.sflag [#allocation4], %s183
          %s185 = sand.u32 %s45, 1
          %s186 = smul.addr %s185, 16
          %s187 = scalar_lea.vmem [#allocation3], %s186
          %189 = vsyncadd %s184, 0
          %s190 = smul.addr %s24, 2
          %s191 = smul.addr %s190, 8
          %s192 = scalar_lea.hbm %s0, %s191
          %s194 = sshll.u32 %s192, 4
          %s195 = int_to_ptr.hbm [resolvable:$true] %s194
          %s196 = sshll.u32 %s187, 4
          %s197 = int_to_ptr.vmem [resolvable:$true] %s196
          %199 = dma.hbm_to_vmem [thread:$0]  %s195, 256, %s197, %s184
        $region32: #{tpu_custom_call.1} parent=27 // pred_fallthru
          _
      $region28: #{tpu_custom_call.1} parent=5 // pred_fallthru
        _
      %p200 = scmp.le.s32.totalorder 1, %s16
      %p201 = scmp.lt.s32.totalorder %s16, 3
      %p202 = pnand %p200, %p201
      %p203 = pneg %p202
      // Predicated region
      $region33: #{tpu_custom_call.1} parent=5 // pred_check
        _
      $region34: #{tpu_custom_call.1} parent=5 // pred_check_branch
        %205 = sbr.rel (%p202) target = $region36
      $region35: #{tpu_custom_call.1} parent=5 // pred_region
        %s206 = ssub.s32 %s16, 1
        %s207 = sand.u32 %s48, 1
        %s208 = scalar_lea.sflag [#allocation4], %s207
        %s209 = sand.u32 %s48, 1
        %s210 = smul.addr %s209, 16
        %s211 = scalar_lea.vmem [#allocation3], %s210
        // Predicated region
        $region37: #{tpu_custom_call.1} parent=35 // pred_check
          %p212 = pneg %p61
        $region38: #{tpu_custom_call.1} parent=35 // pred_check_branch
          %214 = sbr.rel (%p212) target = $region40
        $region39: #{tpu_custom_call.1} parent=35 // pred_region
          %216 = dma.done %s208, 256
        $region40: #{tpu_custom_call.1} parent=35 // pred_fallthru
          _
        %s217 = sand.u32 %s48, 1
        %s218 = scalar_lea.sflag [#allocation4], %s217
        %s219 = sand.u32 %s48, 1
        %s220 = smul.addr %s219, 16
        %s221 = scalar_lea.vmem [#allocation3], %s220
        %p222 = pneg %p61
        %p223 = pneg %p58
        %p224 = pneg %p82
        %p225 = pneg %p79
        %p226 = pneg %p103
        %p227 = pneg %p100
        %p228 = pneg %p124
        %p229 = pneg %p121
        %p230 = pneg %p152
        %p231 = pneg %p149
        %s232 = sand.u32 %s139, 1
        %s233 = scalar_lea.sflag [#allocation5], %s232
        %s234 = sand.u32 %s139, 1
        %s235 = smul.addr %s234, 16
        %s236 = scalar_lea.vmem [#allocation6], %s235
        %v237 = vld [vmem:[%s211] sm:$0xff]
        %v238 = vld [vmem:[%s211 + $0x8] sm:$0xff]
        %v239 = vld [vmem:[%s1] sm:$0xff]
        %v240 = vld [vmem:[%s1 + $0x8] sm:$0xff]
        %v241 = vadd.f32 %v237, %v239
        %v242 = vadd.f32 %v238, %v240
        %p243 = scmp.eq.s32.totalorder %s28, 0
        // Predicated region
        $region41: #{tpu_custom_call.1} parent=35 // pred_check
          %p244 = pneg %p243
        $region42: #{tpu_custom_call.1} parent=35 // pred_check_branch
          %246 = sbr.rel (%p244) target = $region44
        $region43: #{tpu_custom_call.1} parent=35 // pred_region
          %v247 = vld [vmem:[%s2] sm:$0xff]
          %vm248 = vcmask 64512
          %v250 = vsel %vm248, %v247, 0
          %252 = vmatpush.msra.mxu0 0.0
          %253 = vmatpush.msra.mxu0 0.0
          %254 = vmatpush.msra.mxu0 0.0
          %255 = vmatpush.msra.mxu0 0.0
          %256 = vmatpush.msra.mxu0 0.0
          %257 = vmatpush.msra.mxu0 0.0
          %258 = vmatpush.msra.mxu0 0.0
          %259 = vmatpush.msra.mxu0 0.0
          %260 = vmatpush.msra.mxu0 0.0
          %261 = vmatpush.msra.mxu0 0.0
          %262 = vmatpush.msra.mxu0 0.0
          %263 = vmatpush.msra.mxu0 0.0
          %264 = vmatpush.msra.mxu0 0.0
          %265 = vmatpush.msra.mxu0 0.0
          %266 = vmatpush.msra.mxu0 0.0
          %267 = vmatpush.msra.mxu0 %v241
          %268 = vmatmul.f32.gmra.mxu0 %v250
          %v269 = vpop.f32.mrf.mxu0
          %v270 = vadd.f32 0.0, %v269
          %271 = vdwg.mxu0
          %272 = vmatpush.msra.mxu0 0.0
          %273 = vmatpush.msra.mxu0 0.0
          %274 = vmatpush.msra.mxu0 0.0
          %275 = vmatpush.msra.mxu0 0.0
          %276 = vmatpush.msra.mxu0 0.0
          %277 = vmatpush.msra.mxu0 0.0
          %278 = vmatpush.msra.mxu0 0.0
          %279 = vmatpush.msra.mxu0 0.0
          %280 = vmatpush.msra.mxu0 0.0
          %281 = vmatpush.msra.mxu0 0.0
          %282 = vmatpush.msra.mxu0 0.0
          %283 = vmatpush.msra.mxu0 0.0
          %284 = vmatpush.msra.mxu0 0.0
          %285 = vmatpush.msra.mxu0 0.0
          %286 = vmatpush.msra.mxu0 0.0
          %287 = vmatpush.msra.mxu0 %v242
          %288 = vmatmul.f32.gmra.mxu0 %v250
          %v289 = vpop.f32.mrf.mxu0
          %v290 = vadd.f32 0.0, %v289
          %291 = vdwg.mxu0
          %292 = vst [vmem:[#allocation2] sm:$0xff] %v270
          %293 = vst [vmem:[#allocation2 + $0x8] sm:$0xff] %v290
          %294 = vst [vmem:[%s236] sm:$0xff] 0.0
          %295 = vst [vmem:[%s236 + $0x8] sm:$0xff] 0.0
        $region44: #{tpu_custom_call.1} parent=35 // pred_fallthru
          _
        %v296 = vld [vmem:[%s3] sm:$0xff]
        %v297 = vld [vmem:[%s3 + $0x8] sm:$0xff]
        %vm298 = vcmask 64512
        %v300 = vsel %vm298, %v296, 0
        %v303 = vsel %vm298, %v297, 0
        %305 = vmatpush.msra.mxu0 0.0
        %306 = vmatpush.msra.mxu0 0.0
        %307 = vmatpush.msra.mxu0 0.0
        %308 = vmatpush.msra.mxu0 0.0
        %309 = vmatpush.msra.mxu0 0.0
        %310 = vmatpush.msra.mxu0 0.0
        %311 = vmatpush.msra.mxu0 0.0
        %312 = vmatpush.msra.mxu0 0.0
        %313 = vmatpush.msra.mxu0 0.0
        %314 = vmatpush.msra.mxu0 0.0
        %315 = vmatpush.msra.mxu0 0.0
        %316 = vmatpush.msra.mxu0 0.0
        %317 = vmatpush.msra.mxu0 0.0
        %318 = vmatpush.msra.mxu0 0.0
        %319 = vmatpush.msra.mxu0 0.0
        %320 = vmatpush.msra.mxu0 %v241
        %321 = vmatmul.f32.gmra.mxu0 %v300
        %v322 = vpop.f32.mrf.mxu0
        %v323 = vadd.f32 0.0, %v322
        %324 = vmatmul.f32.gmra.mxu0 %v303
        %v325 = vpop.f32.mrf.mxu0
        %v326 = vadd.f32 0.0, %v325
        %327 = vdwg.mxu0
        %328 = vmatpush.msra.mxu0 0.0
        %329 = vmatpush.msra.mxu0 0.0
        %330 = vmatpush.msra.mxu0 0.0
        %331 = vmatpush.msra.mxu0 0.0
        %332 = vmatpush.msra.mxu0 0.0
        %333 = vmatpush.msra.mxu0 0.0
        %334 = vmatpush.msra.mxu0 0.0
        %335 = vmatpush.msra.mxu0 0.0
        %336 = vmatpush.msra.mxu0 0.0
        %337 = vmatpush.msra.mxu0 0.0
        %338 = vmatpush.msra.mxu0 0.0
        %339 = vmatpush.msra.mxu0 0.0
        %340 = vmatpush.msra.mxu0 0.0
        %341 = vmatpush.msra.mxu0 0.0
        %342 = vmatpush.msra.mxu0 0.0
        %343 = vmatpush.msra.mxu0 %v242
        %344 = vmatmul.f32.gmra.mxu0 %v300
        %v345 = vpop.f32.mrf.mxu0
        %v346 = vadd.f32 0.0, %v345
        %347 = vmatmul.f32.gmra.mxu0 %v303
        %v348 = vpop.f32.mrf.mxu0
        %v349 = vadd.f32 0.0, %v348
        %350 = vdwg.mxu0
        %v351 = vld [vmem:[#allocation2] sm:$0xff]
        %v352 = vld [vmem:[#allocation2 + $0x8] sm:$0xff]
        %353 = vxpose.xlu0.b32.start [1/16] %v323, 128
        %354 = vxpose.xlu0.b32.cont [2/16] 0.0, 128
        %355 = vxpose.xlu0.b32.cont [3/16] 0.0, 128
        %356 = vxpose.xlu0.b32.cont [4/16] 0.0, 128
        %357 = vxpose.xlu0.b32.cont [5/16] 0.0, 128
        %358 = vxpose.xlu0.b32.cont [6/16] 0.0, 128
        %359 = vxpose.xlu0.b32.cont [7/16] 0.0, 128
        %360 = vxpose.xlu0.b32.cont [8/16] 0.0, 128
        %361 = vxpose.xlu0.b32.cont [9/16] 0.0, 128
        %362 = vxpose.xlu0.b32.cont [10/16] 0.0, 128
        %363 = vxpose.xlu0.b32.cont [11/16] 0.0, 128
        %364 = vxpose.xlu0.b32.cont [12/16] 0.0, 128
        %365 = vxpose.xlu0.b32.cont [13/16] 0.0, 128
        %366 = vxpose.xlu0.b32.cont [14/16] 0.0, 128
        %367 = vxpose.xlu0.b32.cont [15/16] 0.0, 128
        %368 = vxpose.xlu0.b32.end [16/16] 0.0, 128
        %v369 = vpop.trf.xlu0
        %v370 = vpop.trf.xlu0
        %v371 = vpop.trf.xlu0
        %v372 = vpop.trf.xlu0
        %v373 = vpop.trf.xlu0
        %v374 = vpop.trf.xlu0
        %v375 = vpop.trf.xlu0
        %v376 = vpop.trf.xlu0
        %v377 = vpop.trf.xlu0
        %v378 = vpop.trf.xlu0
        %v379 = vpop.trf.xlu0
        %v380 = vpop.trf.xlu0
        %v381 = vpop.trf.xlu0
        %v382 = vpop.trf.xlu0
        %v383 = vpop.trf.xlu0
        %v384 = vpop.trf.xlu0
        %385 = vxpose.xlu0.b32.start [1/16] %v346, 128
        %386 = vxpose.xlu0.b32.cont [2/16] 0.0, 128
        %387 = vxpose.xlu0.b32.cont [3/16] 0.0, 128
        %388 = vxpose.xlu0.b32.cont [4/16] 0.0, 128
        %389 = vxpose.xlu0.b32.cont [5/16] 0.0, 128
        %390 = vxpose.xlu0.b32.cont [6/16] 0.0, 128
        %391 = vxpose.xlu0.b32.cont [7/16] 0.0, 128
        %392 = vxpose.xlu0.b32.cont [8/16] 0.0, 128
        %393 = vxpose.xlu0.b32.cont [9/16] 0.0, 128
        %394 = vxpose.xlu0.b32.cont [10/16] 0.0, 128
        %395 = vxpose.xlu0.b32.cont [11/16] 0.0, 128
        %396 = vxpose.xlu0.b32.cont [12/16] 0.0, 128
        %397 = vxpose.xlu0.b32.cont [13/16] 0.0, 128
        %398 = vxpose.xlu0.b32.cont [14/16] 0.0, 128
        %399 = vxpose.xlu0.b32.cont [15/16] 0.0, 128
        %400 = vxpose.xlu0.b32.end [16/16] 0.0, 128
        %v401 = vpop.trf.xlu0
        %v402 = vpop.trf.xlu0
        %v403 = vpop.trf.xlu0
        %v404 = vpop.trf.xlu0
        %v405 = vpop.trf.xlu0
        %v406 = vpop.trf.xlu0
        %v407 = vpop.trf.xlu0
        %v408 = vpop.trf.xlu0
        %v409 = vpop.trf.xlu0
        %v410 = vpop.trf.xlu0
        %v411 = vpop.trf.xlu0
        %v412 = vpop.trf.xlu0
        %v413 = vpop.trf.xlu0
        %v414 = vpop.trf.xlu0
        %v415 = vpop.trf.xlu0
        %v416 = vpop.trf.xlu0
        %v418 = vsel %vm298, %v369, 0
        %v421 = vsel %vm298, %v370, 0
        %v424 = vsel %vm298, %v371, 0
        %v427 = vsel %vm298, %v372, 0
        %v430 = vsel %vm298, %v373, 0
        %v433 = vsel %vm298, %v374, 0
        %v436 = vsel %vm298, %v375, 0
        %v439 = vsel %vm298, %v376, 0
        %v442 = vsel %vm298, %v377, 0
        %v445 = vsel %vm298, %v378, 0
        %v448 = vsel %vm298, %v379, 0
        %v451 = vsel %vm298, %v380, 0
        %v454 = vsel %vm298, %v381, 0
        %v457 = vsel %vm298, %v382, 0
        %v460 = vsel %vm298, %v383, 0
        %v463 = vsel %vm298, %v384, 0
        %v466 = vsel %vm298, %v401, 0
        %v469 = vsel %vm298, %v402, 0
        %v472 = vsel %vm298, %v403, 0
        %v475 = vsel %vm298, %v404, 0
        %v478 = vsel %vm298, %v405, 0
        %v481 = vsel %vm298, %v406, 0
        %v484 = vsel %vm298, %v407, 0
        %v487 = vsel %vm298, %v408, 0
        %v490 = vsel %vm298, %v409, 0
        %v493 = vsel %vm298, %v410, 0
        %v496 = vsel %vm298, %v411, 0
        %v499 = vsel %vm298, %v412, 0
        %v502 = vsel %vm298, %v413, 0
        %v505 = vsel %vm298, %v414, 0
        %v508 = vsel %vm298, %v415, 0
        %v511 = vsel %vm298, %v416, 0
        %513 = vmatpush.msra.mxu0 0.0
        %514 = vmatpush.msra.mxu0 0.0
        %515 = vmatpush.msra.mxu0 0.0
        %516 = vmatpush.msra.mxu0 0.0
        %517 = vmatpush.msra.mxu0 0.0
        %518 = vmatpush.msra.mxu0 0.0
        %519 = vmatpush.msra.mxu0 0.0
        %520 = vmatpush.msra.mxu0 0.0
        %521 = vmatpush.msra.mxu0 0.0
        %522 = vmatpush.msra.mxu0 0.0
        %523 = vmatpush.msra.mxu0 0.0
        %524 = vmatpush.msra.mxu0 0.0
        %525 = vmatpush.msra.mxu0 0.0
        %526 = vmatpush.msra.mxu0 0.0
        %527 = vmatpush.msra.mxu0 0.0
        %528 = vmatpush.msra.mxu0 %v351
        %529 = vmatmul.f32.gmra.mxu0 %v418
        %v530 = vpop.f32.mrf.mxu0
        %v531 = vadd.f32 0.0, %v530
        %532 = vmatmul.f32.gmra.mxu0 %v421
        %v533 = vpop.f32.mrf.mxu0
        %v534 = vadd.f32 0.0, %v533
        %535 = vmatmul.f32.gmra.mxu0 %v424
        %v536 = vpop.f32.mrf.mxu0
        %v537 = vadd.f32 0.0, %v536
        %538 = vmatmul.f32.gmra.mxu0 %v427
        %v539 = vpop.f32.mrf.mxu0
        %v540 = vadd.f32 0.0, %v539
        %541 = vmatmul.f32.gmra.mxu0 %v430
        %v542 = vpop.f32.mrf.mxu0
        %v543 = vadd.f32 0.0, %v542
        %544 = vmatmul.f32.gmra.mxu0 %v433
        %v545 = vpop.f32.mrf.mxu0
        %v546 = vadd.f32 0.0, %v545
        %547 = vmatmul.f32.gmra.mxu0 %v436
        %v548 = vpop.f32.mrf.mxu0
        %v549 = vadd.f32 0.0, %v548
        %550 = vmatmul.f32.gmra.mxu0 %v439
        %v551 = vpop.f32.mrf.mxu0
        %v552 = vadd.f32 0.0, %v551
        %553 = vmatmul.f32.gmra.mxu0 %v442
        %v554 = vpop.f32.mrf.mxu0
        %v555 = vadd.f32 0.0, %v554
        %556 = vmatmul.f32.gmra.mxu0 %v445
        %v557 = vpop.f32.mrf.mxu0
        %v558 = vadd.f32 0.0, %v557
        %559 = vmatmul.f32.gmra.mxu0 %v448
        %v560 = vpop.f32.mrf.mxu0
        %v561 = vadd.f32 0.0, %v560
        %562 = vmatmul.f32.gmra.mxu0 %v451
        %v563 = vpop.f32.mrf.mxu0
        %v564 = vadd.f32 0.0, %v563
        %565 = vmatmul.f32.gmra.mxu0 %v454
        %v566 = vpop.f32.mrf.mxu0
        %v567 = vadd.f32 0.0, %v566
        %568 = vmatmul.f32.gmra.mxu0 %v457
        %v569 = vpop.f32.mrf.mxu0
        %v570 = vadd.f32 0.0, %v569
        %571 = vmatmul.f32.gmra.mxu0 %v460
        %v572 = vpop.f32.mrf.mxu0
        %v573 = vadd.f32 0.0, %v572
        %574 = vmatmul.f32.gmra.mxu0 %v463
        %v575 = vpop.f32.mrf.mxu0
        %v576 = vadd.f32 0.0, %v575
        %577 = vmatmul.f32.gmra.mxu0 %v466
        %v578 = vpop.f32.mrf.mxu0
        %v579 = vadd.f32 0.0, %v578
        %580 = vmatmul.f32.gmra.mxu0 %v469
        %v581 = vpop.f32.mrf.mxu0
        %v582 = vadd.f32 0.0, %v581
        %583 = vmatmul.f32.gmra.mxu0 %v472
        %v584 = vpop.f32.mrf.mxu0
        %v585 = vadd.f32 0.0, %v584
        %586 = vmatmul.f32.gmra.mxu0 %v475
        %v587 = vpop.f32.mrf.mxu0
        %v588 = vadd.f32 0.0, %v587
        %589 = vmatmul.f32.gmra.mxu0 %v478
        %v590 = vpop.f32.mrf.mxu0
        %v591 = vadd.f32 0.0, %v590
        %592 = vmatmul.f32.gmra.mxu0 %v481
        %v593 = vpop.f32.mrf.mxu0
        %v594 = vadd.f32 0.0, %v593
        %595 = vmatmul.f32.gmra.mxu0 %v484
        %v596 = vpop.f32.mrf.mxu0
        %v597 = vadd.f32 0.0, %v596
        %598 = vmatmul.f32.gmra.mxu0 %v487
        %v599 = vpop.f32.mrf.mxu0
        %v600 = vadd.f32 0.0, %v599
        %601 = vmatmul.f32.gmra.mxu0 %v490
        %v602 = vpop.f32.mrf.mxu0
        %v603 = vadd.f32 0.0, %v602
        %604 = vmatmul.f32.gmra.mxu0 %v493
        %v605 = vpop.f32.mrf.mxu0
        %v606 = vadd.f32 0.0, %v605
        %607 = vmatmul.f32.gmra.mxu0 %v496
        %v608 = vpop.f32.mrf.mxu0
        %v609 = vadd.f32 0.0, %v608
        %610 = vmatmul.f32.gmra.mxu0 %v499
        %v611 = vpop.f32.mrf.mxu0
        %v612 = vadd.f32 0.0, %v611
        %613 = vmatmul.f32.gmra.mxu0 %v502
        %v614 = vpop.f32.mrf.mxu0
        %v615 = vadd.f32 0.0, %v614
        %616 = vmatmul.f32.gmra.mxu0 %v505
        %v617 = vpop.f32.mrf.mxu0
        %v618 = vadd.f32 0.0, %v617
        %619 = vmatmul.f32.gmra.mxu0 %v508
        %v620 = vpop.f32.mrf.mxu0
        %v621 = vadd.f32 0.0, %v620
        %622 = vmatmul.f32.gmra.mxu0 %v511
        %v623 = vpop.f32.mrf.mxu0
        %v624 = vadd.f32 0.0, %v623
        %625 = vdwg.mxu0
        %626 = vmatpush.msra.mxu0 0.0
        %627 = vmatpush.msra.mxu0 0.0
        %628 = vmatpush.msra.mxu0 0.0
        %629 = vmatpush.msra.mxu0 0.0
        %630 = vmatpush.msra.mxu0 0.0
        %631 = vmatpush.msra.mxu0 0.0
        %632 = vmatpush.msra.mxu0 0.0
        %633 = vmatpush.msra.mxu0 0.0
        %634 = vmatpush.msra.mxu0 0.0
        %635 = vmatpush.msra.mxu0 0.0
        %636 = vmatpush.msra.mxu0 0.0
        %637 = vmatpush.msra.mxu0 0.0
        %638 = vmatpush.msra.mxu0 0.0
        %639 = vmatpush.msra.mxu0 0.0
        %640 = vmatpush.msra.mxu0 0.0
        %641 = vmatpush.msra.mxu0 %v352
        %642 = vmatmul.f32.gmra.mxu0 %v418
        %v643 = vpop.f32.mrf.mxu0
        %v644 = vadd.f32 0.0, %v643
        %645 = vmatmul.f32.gmra.mxu0 %v421
        %v646 = vpop.f32.mrf.mxu0
        %v647 = vadd.f32 0.0, %v646
        %648 = vmatmul.f32.gmra.mxu0 %v424
        %v649 = vpop.f32.mrf.mxu0
        %v650 = vadd.f32 0.0, %v649
        %651 = vmatmul.f32.gmra.mxu0 %v427
        %v652 = vpop.f32.mrf.mxu0
        %v653 = vadd.f32 0.0, %v652
        %654 = vmatmul.f32.gmra.mxu0 %v430
        %v655 = vpop.f32.mrf.mxu0
        %v656 = vadd.f32 0.0, %v655
        %657 = vmatmul.f32.gmra.mxu0 %v433
        %v658 = vpop.f32.mrf.mxu0
        %v659 = vadd.f32 0.0, %v658
        %660 = vmatmul.f32.gmra.mxu0 %v436
        %v661 = vpop.f32.mrf.mxu0
        %v662 = vadd.f32 0.0, %v661
        %663 = vmatmul.f32.gmra.mxu0 %v439
        %v664 = vpop.f32.mrf.mxu0
        %v665 = vadd.f32 0.0, %v664
        %666 = vmatmul.f32.gmra.mxu0 %v442
        %v667 = vpop.f32.mrf.mxu0
        %v668 = vadd.f32 0.0, %v667
        %669 = vmatmul.f32.gmra.mxu0 %v445
        %v670 = vpop.f32.mrf.mxu0
        %v671 = vadd.f32 0.0, %v670
        %672 = vmatmul.f32.gmra.mxu0 %v448
        %v673 = vpop.f32.mrf.mxu0
        %v674 = vadd.f32 0.0, %v673
        %675 = vmatmul.f32.gmra.mxu0 %v451
        %v676 = vpop.f32.mrf.mxu0
        %v677 = vadd.f32 0.0, %v676
        %678 = vmatmul.f32.gmra.mxu0 %v454
        %v679 = vpop.f32.mrf.mxu0
        %v680 = vadd.f32 0.0, %v679
        %681 = vmatmul.f32.gmra.mxu0 %v457
        %v682 = vpop.f32.mrf.mxu0
        %v683 = vadd.f32 0.0, %v682
        %684 = vmatmul.f32.gmra.mxu0 %v460
        %v685 = vpop.f32.mrf.mxu0
        %v686 = vadd.f32 0.0, %v685
        %687 = vmatmul.f32.gmra.mxu0 %v463
        %v688 = vpop.f32.mrf.mxu0
        %v689 = vadd.f32 0.0, %v688
        %690 = vmatmul.f32.gmra.mxu0 %v466
        %v691 = vpop.f32.mrf.mxu0
        %v692 = vadd.f32 0.0, %v691
        %693 = vmatmul.f32.gmra.mxu0 %v469
        %v694 = vpop.f32.mrf.mxu0
        %v695 = vadd.f32 0.0, %v694
        %696 = vmatmul.f32.gmra.mxu0 %v472
        %v697 = vpop.f32.mrf.mxu0
        %v698 = vadd.f32 0.0, %v697
        %699 = vmatmul.f32.gmra.mxu0 %v475
        %v700 = vpop.f32.mrf.mxu0
        %v701 = vadd.f32 0.0, %v700
        %702 = vmatmul.f32.gmra.mxu0 %v478
        %v703 = vpop.f32.mrf.mxu0
        %v704 = vadd.f32 0.0, %v703
        %705 = vmatmul.f32.gmra.mxu0 %v481
        %v706 = vpop.f32.mrf.mxu0
        %v707 = vadd.f32 0.0, %v706
        %708 = vmatmul.f32.gmra.mxu0 %v484
        %v709 = vpop.f32.mrf.mxu0
        %v710 = vadd.f32 0.0, %v709
        %711 = vmatmul.f32.gmra.mxu0 %v487
        %v712 = vpop.f32.mrf.mxu0
        %v713 = vadd.f32 0.0, %v712
        %714 = vmatmul.f32.gmra.mxu0 %v490
        %v715 = vpop.f32.mrf.mxu0
        %v716 = vadd.f32 0.0, %v715
        %717 = vmatmul.f32.gmra.mxu0 %v493
        %v718 = vpop.f32.mrf.mxu0
        %v719 = vadd.f32 0.0, %v718
        %720 = vmatmul.f32.gmra.mxu0 %v496
        %v721 = vpop.f32.mrf.mxu0
        %v722 = vadd.f32 0.0, %v721
        %723 = vmatmul.f32.gmra.mxu0 %v499
        %v724 = vpop.f32.mrf.mxu0
        %v725 = vadd.f32 0.0, %v724
        %726 = vmatmul.f32.gmra.mxu0 %v502
        %v727 = vpop.f32.mrf.mxu0
        %v728 = vadd.f32 0.0, %v727
        %729 = vmatmul.f32.gmra.mxu0 %v505
        %v730 = vpop.f32.mrf.mxu0
        %v731 = vadd.f32 0.0, %v730
        %732 = vmatmul.f32.gmra.mxu0 %v508
        %v733 = vpop.f32.mrf.mxu0
        %v734 = vadd.f32 0.0, %v733
        %735 = vmatmul.f32.gmra.mxu0 %v511
        %v736 = vpop.f32.mrf.mxu0
        %v737 = vadd.f32 0.0, %v736
        %738 = vdwg.mxu0
        %v739 = vmax.f32 %v531, %v644
        %740 = vmax.xlane.f32.xlu0 %v739
        %v741 = vpop.xlane.xlu0 %740
        %v742 = vmax.f32 %v534, %v647
        %743 = vmax.xlane.f32.xlu0 %v742
        %v744 = vpop.xlane.xlu0 %743
        %v745 = vmax.f32 %v537, %v650
        %746 = vmax.xlane.f32.xlu0 %v745
        %v747 = vpop.xlane.xlu0 %746
        %v748 = vmax.f32 %v540, %v653
        %749 = vmax.xlane.f32.xlu0 %v748
        %v750 = vpop.xlane.xlu0 %749
        %v751 = vmax.f32 %v543, %v656
        %752 = vmax.xlane.f32.xlu0 %v751
        %v753 = vpop.xlane.xlu0 %752
        %v754 = vmax.f32 %v546, %v659
        %755 = vmax.xlane.f32.xlu0 %v754
        %v756 = vpop.xlane.xlu0 %755
        %v757 = vmax.f32 %v549, %v662
        %758 = vmax.xlane.f32.xlu0 %v757
        %v759 = vpop.xlane.xlu0 %758
        %v760 = vmax.f32 %v552, %v665
        %761 = vmax.xlane.f32.xlu0 %v760
        %v762 = vpop.xlane.xlu0 %761
        %v763 = vmax.f32 %v555, %v668
        %764 = vmax.xlane.f32.xlu0 %v763
        %v765 = vpop.xlane.xlu0 %764
        %v766 = vmax.f32 %v558, %v671
        %767 = vmax.xlane.f32.xlu0 %v766
        %v768 = vpop.xlane.xlu0 %767
        %v769 = vmax.f32 %v561, %v674
        %770 = vmax.xlane.f32.xlu0 %v769
        %v771 = vpop.xlane.xlu0 %770
        %v772 = vmax.f32 %v564, %v677
        %773 = vmax.xlane.f32.xlu0 %v772
        %v774 = vpop.xlane.xlu0 %773
        %v775 = vmax.f32 %v567, %v680
        %776 = vmax.xlane.f32.xlu0 %v775
        %v777 = vpop.xlane.xlu0 %776
        %v778 = vmax.f32 %v570, %v683
        %779 = vmax.xlane.f32.xlu0 %v778
        %v780 = vpop.xlane.xlu0 %779
        %v781 = vmax.f32 %v573, %v686
        %782 = vmax.xlane.f32.xlu0 %v781
        %v783 = vpop.xlane.xlu0 %782
        %v784 = vmax.f32 %v576, %v689
        %785 = vmax.xlane.f32.xlu0 %v784
        %v786 = vpop.xlane.xlu0 %785
        %v787 = vmax.f32 %v579, %v692
        %788 = vmax.xlane.f32.xlu0 %v787
        %v789 = vpop.xlane.xlu0 %788
        %v790 = vmax.f32 %v582, %v695
        %791 = vmax.xlane.f32.xlu0 %v790
        %v792 = vpop.xlane.xlu0 %791
        %v793 = vmax.f32 %v585, %v698
        %794 = vmax.xlane.f32.xlu0 %v793
        %v795 = vpop.xlane.xlu0 %794
        %v796 = vmax.f32 %v588, %v701
        %797 = vmax.xlane.f32.xlu0 %v796
        %v798 = vpop.xlane.xlu0 %797
        %v799 = vmax.f32 %v591, %v704
        %800 = vmax.xlane.f32.xlu0 %v799
        %v801 = vpop.xlane.xlu0 %800
        %v802 = vmax.f32 %v594, %v707
        %803 = vmax.xlane.f32.xlu0 %v802
        %v804 = vpop.xlane.xlu0 %803
        %v805 = vmax.f32 %v597, %v710
        %806 = vmax.xlane.f32.xlu0 %v805
        %v807 = vpop.xlane.xlu0 %806
        %v808 = vmax.f32 %v600, %v713
        %809 = vmax.xlane.f32.xlu0 %v808
        %v810 = vpop.xlane.xlu0 %809
        %v811 = vmax.f32 %v603, %v716
        %812 = vmax.xlane.f32.xlu0 %v811
        %v813 = vpop.xlane.xlu0 %812
        %v814 = vmax.f32 %v606, %v719
        %815 = vmax.xlane.f32.xlu0 %v814
        %v816 = vpop.xlane.xlu0 %815
        %v817 = vmax.f32 %v609, %v722
        %818 = vmax.xlane.f32.xlu0 %v817
        %v819 = vpop.xlane.xlu0 %818
        %v820 = vmax.f32 %v612, %v725
        %821 = vmax.xlane.f32.xlu0 %v820
        %v822 = vpop.xlane.xlu0 %821
        %v823 = vmax.f32 %v615, %v728
        %824 = vmax.xlane.f32.xlu0 %v823
        %v825 = vpop.xlane.xlu0 %824
        %v826 = vmax.f32 %v618, %v731
        %827 = vmax.xlane.f32.xlu0 %v826
        %v828 = vpop.xlane.xlu0 %827
        %v829 = vmax.f32 %v621, %v734
        %830 = vmax.xlane.f32.xlu0 %v829
        %v831 = vpop.xlane.xlu0 %830
        %v832 = vmax.f32 %v624, %v737
        %833 = vmax.xlane.f32.xlu0 %v832
        %v834 = vpop.xlane.xlu0 %833
        %v835 = vsub.f32 %v531, %v741
        %v836 = vsub.f32 %v644, %v741
        %v837 = vsub.f32 %v534, %v744
        %v838 = vsub.f32 %v647, %v744
        %v839 = vsub.f32 %v537, %v747
        %v840 = vsub.f32 %v650, %v747
        %v841 = vsub.f32 %v540, %v750
        %v842 = vsub.f32 %v653, %v750
        %v843 = vsub.f32 %v543, %v753
        %v844 = vsub.f32 %v656, %v753
        %v845 = vsub.f32 %v546, %v756
        %v846 = vsub.f32 %v659, %v756
        %v847 = vsub.f32 %v549, %v759
        %v848 = vsub.f32 %v662, %v759
        %v849 = vsub.f32 %v552, %v762
        %v850 = vsub.f32 %v665, %v762
        %v851 = vsub.f32 %v555, %v765
        %v852 = vsub.f32 %v668, %v765
        %v853 = vsub.f32 %v558, %v768
        %v854 = vsub.f32 %v671, %v768
        %v855 = vsub.f32 %v561, %v771
        %v856 = vsub.f32 %v674, %v771
        %v857 = vsub.f32 %v564, %v774
        %v858 = vsub.f32 %v677, %v774
        %v859 = vsub.f32 %v567, %v777
        %v860 = vsub.f32 %v680, %v777
        %v861 = vsub.f32 %v570, %v780
        %v862 = vsub.f32 %v683, %v780
        %v863 = vsub.f32 %v573, %v783
        %v864 = vsub.f32 %v686, %v783
        %v865 = vsub.f32 %v576, %v786
        %v866 = vsub.f32 %v689, %v786
        %v867 = vsub.f32 %v579, %v789
        %v868 = vsub.f32 %v692, %v789
        %v869 = vsub.f32 %v582, %v792
        %v870 = vsub.f32 %v695, %v792
        %v871 = vsub.f32 %v585, %v795
        %v872 = vsub.f32 %v698, %v795
        %v873 = vsub.f32 %v588, %v798
        %v874 = vsub.f32 %v701, %v798
        %v875 = vsub.f32 %v591, %v801
        %v876 = vsub.f32 %v704, %v801
        %v877 = vsub.f32 %v594, %v804
        %v878 = vsub.f32 %v707, %v804
        %v879 = vsub.f32 %v597, %v807
        %v880 = vsub.f32 %v710, %v807
        %v881 = vsub.f32 %v600, %v810
        %v882 = vsub.f32 %v713, %v810
        %v883 = vsub.f32 %v603, %v813
        %v884 = vsub.f32 %v716, %v813
        %v885 = vsub.f32 %v606, %v816
        %v886 = vsub.f32 %v719, %v816
        %v887 = vsub.f32 %v609, %v819
        %v888 = vsub.f32 %v722, %v819
        %v889 = vsub.f32 %v612, %v822
        %v890 = vsub.f32 %v725, %v822
        %v891 = vsub.f32 %v615, %v825
        %v892 = vsub.f32 %v728, %v825
        %v893 = vsub.f32 %v618, %v828
        %v894 = vsub.f32 %v731, %v828
        %v895 = vsub.f32 %v621, %v831
        %v896 = vsub.f32 %v734, %v831
        %v897 = vsub.f32 %v624, %v834
        %v898 = vsub.f32 %v737, %v834
        %v899 = vmul.f32 %v835, 1.442695
        %v900 = vpow.pop %v899
        %v901 = vmul.f32 %v836, 1.442695
        %v902 = vpow.pop %v901
        %v903 = vmul.f32 %v837, 1.442695
        %v904 = vpow.pop %v903
        %v905 = vmul.f32 %v838, 1.442695
        %v906 = vpow.pop %v905
        %v907 = vmul.f32 %v839, 1.442695
        %v908 = vpow.pop %v907
        %v909 = vmul.f32 %v840, 1.442695
        %v910 = vpow.pop %v909
        %v911 = vmul.f32 %v841, 1.442695
        %v912 = vpow.pop %v911
        %v913 = vmul.f32 %v842, 1.442695
        %v914 = vpow.pop %v913
        %v915 = vmul.f32 %v843, 1.442695
        %v916 = vpow.pop %v915
        %v917 = vmul.f32 %v844, 1.442695
        %v918 = vpow.pop %v917
        %v919 = vmul.f32 %v845, 1.442695
        %v920 = vpow.pop %v919
        %v921 = vmul.f32 %v846, 1.442695
        %v922 = vpow.pop %v921
        %v923 = vmul.f32 %v847, 1.442695
        %v924 = vpow.pop %v923
        %v925 = vmul.f32 %v848, 1.442695
        %v926 = vpow.pop %v925
        %v927 = vmul.f32 %v849, 1.442695
        %v928 = vpow.pop %v927
        %v929 = vmul.f32 %v850, 1.442695
        %v930 = vpow.pop %v929
        %v931 = vmul.f32 %v851, 1.442695
        %v932 = vpow.pop %v931
        %v933 = vmul.f32 %v852, 1.442695
        %v934 = vpow.pop %v933
        %v935 = vmul.f32 %v853, 1.442695
        %v936 = vpow.pop %v935
        %v937 = vmul.f32 %v854, 1.442695
        %v938 = vpow.pop %v937
        %v939 = vmul.f32 %v855, 1.442695
        %v940 = vpow.pop %v939
        %v941 = vmul.f32 %v856, 1.442695
        %v942 = vpow.pop %v941
        %v943 = vmul.f32 %v857, 1.442695
        %v944 = vpow.pop %v943
        %v945 = vmul.f32 %v858, 1.442695
        %v946 = vpow.pop %v945
        %v947 = vmul.f32 %v859, 1.442695
        %v948 = vpow.pop %v947
        %v949 = vmul.f32 %v860, 1.442695
        %v950 = vpow.pop %v949
        %v951 = vmul.f32 %v861, 1.442695
        %v952 = vpow.pop %v951
        %v953 = vmul.f32 %v862, 1.442695
        %v954 = vpow.pop %v953
        %v955 = vmul.f32 %v863, 1.442695
        %v956 = vpow.pop %v955
        %v957 = vmul.f32 %v864, 1.442695
        %v958 = vpow.pop %v957
        %v959 = vmul.f32 %v865, 1.442695
        %v960 = vpow.pop %v959
        %v961 = vmul.f32 %v866, 1.442695
        %v962 = vpow.pop %v961
        %v963 = vmul.f32 %v867, 1.442695
        %v964 = vpow.pop %v963
        %v965 = vmul.f32 %v868, 1.442695
        %v966 = vpow.pop %v965
        %v967 = vmul.f32 %v869, 1.442695
        %v968 = vpow.pop %v967
        %v969 = vmul.f32 %v870, 1.442695
        %v970 = vpow.pop %v969
        %v971 = vmul.f32 %v871, 1.442695
        %v972 = vpow.pop %v971
        %v973 = vmul.f32 %v872, 1.442695
        %v974 = vpow.pop %v973
        %v975 = vmul.f32 %v873, 1.442695
        %v976 = vpow.pop %v975
        %v977 = vmul.f32 %v874, 1.442695
        %v978 = vpow.pop %v977
        %v979 = vmul.f32 %v875, 1.442695
        %v980 = vpow.pop %v979
        %v981 = vmul.f32 %v876, 1.442695
        %v982 = vpow.pop %v981
        %v983 = vmul.f32 %v877, 1.442695
        %v984 = vpow.pop %v983
        %v985 = vmul.f32 %v878, 1.442695
        %v986 = vpow.pop %v985
        %v987 = vmul.f32 %v879, 1.442695
        %v988 = vpow.pop %v987
        %v989 = vmul.f32 %v880, 1.442695
        %v990 = vpow.pop %v989
        %v991 = vmul.f32 %v881, 1.442695
        %v992 = vpow.pop %v991
        %v993 = vmul.f32 %v882, 1.442695
        %v994 = vpow.pop %v993
        %v995 = vmul.f32 %v883, 1.442695
        %v996 = vpow.pop %v995
        %v997 = vmul.f32 %v884, 1.442695
        %v998 = vpow.pop %v997
        %v999 = vmul.f32 %v885, 1.442695
        %v1000 = vpow.pop %v999
        %v1001 = vmul.f32 %v886, 1.442695
        %v1002 = vpow.pop %v1001
        %v1003 = vmul.f32 %v887, 1.442695
        %v1004 = vpow.pop %v1003
        %v1005 = vmul.f32 %v888, 1.442695
        %v1006 = vpow.pop %v1005
        %v1007 = vmul.f32 %v889, 1.442695
        %v1008 = vpow.pop %v1007
        %v1009 = vmul.f32 %v890, 1.442695
        %v1010 = vpow.pop %v1009
        %v1011 = vmul.f32 %v891, 1.442695
        %v1012 = vpow.pop %v1011
        %v1013 = vmul.f32 %v892, 1.442695
        %v1014 = vpow.pop %v1013
        %v1015 = vmul.f32 %v893, 1.442695
        %v1016 = vpow.pop %v1015
        %v1017 = vmul.f32 %v894, 1.442695
        %v1018 = vpow.pop %v1017
        %v1019 = vmul.f32 %v895, 1.442695
        %v1020 = vpow.pop %v1019
        %v1021 = vmul.f32 %v896, 1.442695
        %v1022 = vpow.pop %v1021
        %v1023 = vmul.f32 %v897, 1.442695
        %v1024 = vpow.pop %v1023
        %v1025 = vmul.f32 %v898, 1.442695
        %v1026 = vpow.pop %v1025
        %v1027 = vadd.f32 %v900, %v902
        %1028 = vadd.xlane.f32.xlu0 %v1027
        %v1029 = vpop.xlane.xlu0 %1028
        %v1030 = vadd.f32 %v904, %v906
        %1031 = vadd.xlane.f32.xlu0 %v1030
        %v1032 = vpop.xlane.xlu0 %1031
        %v1033 = vadd.f32 %v908, %v910
        %1034 = vadd.xlane.f32.xlu0 %v1033
        %v1035 = vpop.xlane.xlu0 %1034
        %v1036 = vadd.f32 %v912, %v914
        %1037 = vadd.xlane.f32.xlu0 %v1036
        %v1038 = vpop.xlane.xlu0 %1037
        %v1039 = vadd.f32 %v916, %v918
        %1040 = vadd.xlane.f32.xlu0 %v1039
        %v1041 = vpop.xlane.xlu0 %1040
        %v1042 = vadd.f32 %v920, %v922
        %1043 = vadd.xlane.f32.xlu0 %v1042
        %v1044 = vpop.xlane.xlu0 %1043
        %v1045 = vadd.f32 %v924, %v926
        %1046 = vadd.xlane.f32.xlu0 %v1045
        %v1047 = vpop.xlane.xlu0 %1046
        %v1048 = vadd.f32 %v928, %v930
        %1049 = vadd.xlane.f32.xlu0 %v1048
        %v1050 = vpop.xlane.xlu0 %1049
        %v1051 = vadd.f32 %v932, %v934
        %1052 = vadd.xlane.f32.xlu0 %v1051
        %v1053 = vpop.xlane.xlu0 %1052
        %v1054 = vadd.f32 %v936, %v938
        %1055 = vadd.xlane.f32.xlu0 %v1054
        %v1056 = vpop.xlane.xlu0 %1055
        %v1057 = vadd.f32 %v940, %v942
        %1058 = vadd.xlane.f32.xlu0 %v1057
        %v1059 = vpop.xlane.xlu0 %1058
        %v1060 = vadd.f32 %v944, %v946
        %1061 = vadd.xlane.f32.xlu0 %v1060
        %v1062 = vpop.xlane.xlu0 %1061
        %v1063 = vadd.f32 %v948, %v950
        %1064 = vadd.xlane.f32.xlu0 %v1063
        %v1065 = vpop.xlane.xlu0 %1064
        %v1066 = vadd.f32 %v952, %v954
        %1067 = vadd.xlane.f32.xlu0 %v1066
        %v1068 = vpop.xlane.xlu0 %1067
        %v1069 = vadd.f32 %v956, %v958
        %1070 = vadd.xlane.f32.xlu0 %v1069
        %v1071 = vpop.xlane.xlu0 %1070
        %v1072 = vadd.f32 %v960, %v962
        %1073 = vadd.xlane.f32.xlu0 %v1072
        %v1074 = vpop.xlane.xlu0 %1073
        %v1075 = vadd.f32 %v964, %v966
        %1076 = vadd.xlane.f32.xlu0 %v1075
        %v1077 = vpop.xlane.xlu0 %1076
        %v1078 = vadd.f32 %v968, %v970
        %1079 = vadd.xlane.f32.xlu0 %v1078
        %v1080 = vpop.xlane.xlu0 %1079
        %v1081 = vadd.f32 %v972, %v974
        %1082 = vadd.xlane.f32.xlu0 %v1081
        %v1083 = vpop.xlane.xlu0 %1082
        %v1084 = vadd.f32 %v976, %v978
        %1085 = vadd.xlane.f32.xlu0 %v1084
        %v1086 = vpop.xlane.xlu0 %1085
        %v1087 = vadd.f32 %v980, %v982
        %1088 = vadd.xlane.f32.xlu0 %v1087
        %v1089 = vpop.xlane.xlu0 %1088
        %v1090 = vadd.f32 %v984, %v986
        %1091 = vadd.xlane.f32.xlu0 %v1090
        %v1092 = vpop.xlane.xlu0 %1091
        %v1093 = vadd.f32 %v988, %v990
        %1094 = vadd.xlane.f32.xlu0 %v1093
        %v1095 = vpop.xlane.xlu0 %1094
        %v1096 = vadd.f32 %v992, %v994
        %1097 = vadd.xlane.f32.xlu0 %v1096
        %v1098 = vpop.xlane.xlu0 %1097
        %v1099 = vadd.f32 %v996, %v998
        %1100 = vadd.xlane.f32.xlu0 %v1099
        %v1101 = vpop.xlane.xlu0 %1100
        %v1102 = vadd.f32 %v1000, %v1002
        %1103 = vadd.xlane.f32.xlu0 %v1102
        %v1104 = vpop.xlane.xlu0 %1103
        %v1105 = vadd.f32 %v1004, %v1006
        %1106 = vadd.xlane.f32.xlu0 %v1105
        %v1107 = vpop.xlane.xlu0 %1106
        %v1108 = vadd.f32 %v1008, %v1010
        %1109 = vadd.xlane.f32.xlu0 %v1108
        %v1110 = vpop.xlane.xlu0 %1109
        %v1111 = vadd.f32 %v1012, %v1014
        %1112 = vadd.xlane.f32.xlu0 %v1111
        %v1113 = vpop.xlane.xlu0 %1112
        %v1114 = vadd.f32 %v1016, %v1018
        %1115 = vadd.xlane.f32.xlu0 %v1114
        %v1116 = vpop.xlane.xlu0 %1115
        %v1117 = vadd.f32 %v1020, %v1022
        %1118 = vadd.xlane.f32.xlu0 %v1117
        %v1119 = vpop.xlane.xlu0 %1118
        %v1120 = vadd.f32 %v1024, %v1026
        %1121 = vadd.xlane.f32.xlu0 %v1120
        %v1122 = vpop.xlane.xlu0 %1121
        %v1123 = vrcp.pop %v1029
        %v1124 = vrcp.pop %v1032
        %v1125 = vrcp.pop %v1035
        %v1126 = vrcp.pop %v1038
        %v1127 = vrcp.pop %v1041
        %v1128 = vrcp.pop %v1044
        %v1129 = vrcp.pop %v1047
        %v1130 = vrcp.pop %v1050
        %v1131 = vrcp.pop %v1053
        %v1132 = vrcp.pop %v1056
        %v1133 = vrcp.pop %v1059
        %v1134 = vrcp.pop %v1062
        %v1135 = vrcp.pop %v1065
        %v1136 = vrcp.pop %v1068
        %v1137 = vrcp.pop %v1071
        %v1138 = vrcp.pop %v1074
        %v1139 = vrcp.pop %v1077
        %v1140 = vrcp.pop %v1080
        %v1141 = vrcp.pop %v1083
        %v1142 = vrcp.pop %v1086
        %v1143 = vrcp.pop %v1089
        %v1144 = vrcp.pop %v1092
        %v1145 = vrcp.pop %v1095
        %v1146 = vrcp.pop %v1098
        %v1147 = vrcp.pop %v1101
        %v1148 = vrcp.pop %v1104
        %v1149 = vrcp.pop %v1107
        %v1150 = vrcp.pop %v1110
        %v1151 = vrcp.pop %v1113
        %v1152 = vrcp.pop %v1116
        %v1153 = vrcp.pop %v1119
        %v1154 = vrcp.pop %v1122
        %v1155 = vmul.f32 %v1029, %v1123
        %v1156 = vmul.f32 %v1032, %v1124
        %v1157 = vmul.f32 %v1035, %v1125
        %v1158 = vmul.f32 %v1038, %v1126
        %v1159 = vmul.f32 %v1041, %v1127
        %v1160 = vmul.f32 %v1044, %v1128
        %v1161 = vmul.f32 %v1047, %v1129
        %v1162 = vmul.f32 %v1050, %v1130
        %v1163 = vmul.f32 %v1053, %v1131
        %v1164 = vmul.f32 %v1056, %v1132
        %v1165 = vmul.f32 %v1059, %v1133
        %v1166 = vmul.f32 %v1062, %v1134
        %v1167 = vmul.f32 %v1065, %v1135
        %v1168 = vmul.f32 %v1068, %v1136
        %v1169 = vmul.f32 %v1071, %v1137
        %v1170 = vmul.f32 %v1074, %v1138
        %v1171 = vmul.f32 %v1077, %v1139
        %v1172 = vmul.f32 %v1080, %v1140
        %v1173 = vmul.f32 %v1083, %v1141
        %v1174 = vmul.f32 %v1086, %v1142
        %v1175 = vmul.f32 %v1089, %v1143
        %v1176 = vmul.f32 %v1092, %v1144
        %v1177 = vmul.f32 %v1095, %v1145
        %v1178 = vmul.f32 %v1098, %v1146
        %v1179 = vmul.f32 %v1101, %v1147
        %v1180 = vmul.f32 %v1104, %v1148
        %v1181 = vmul.f32 %v1107, %v1149
        %v1182 = vmul.f32 %v1110, %v1150
        %v1183 = vmul.f32 %v1113, %v1151
        %v1184 = vmul.f32 %v1116, %v1152
        %v1185 = vmul.f32 %v1119, %v1153
        %v1186 = vmul.f32 %v1122, %v1154
        %v1187 = vsub.f32 2.0, %v1155
        %v1188 = vsub.f32 2.0, %v1156
        %v1189 = vsub.f32 2.0, %v1157
        %v1190 = vsub.f32 2.0, %v1158
        %v1191 = vsub.f32 2.0, %v1159
        %v1192 = vsub.f32 2.0, %v1160
        %v1193 = vsub.f32 2.0, %v1161
        %v1194 = vsub.f32 2.0, %v1162
        %v1195 = vsub.f32 2.0, %v1163
        %v1196 = vsub.f32 2.0, %v1164
        %v1197 = vsub.f32 2.0, %v1165
        %v1198 = vsub.f32 2.0, %v1166
        %v1199 = vsub.f32 2.0, %v1167
        %v1200 = vsub.f32 2.0, %v1168
        %v1201 = vsub.f32 2.0, %v1169
        %v1202 = vsub.f32 2.0, %v1170
        %v1203 = vsub.f32 2.0, %v1171
        %v1204 = vsub.f32 2.0, %v1172
        %v1205 = vsub.f32 2.0, %v1173
        %v1206 = vsub.f32 2.0, %v1174
        %v1207 = vsub.f32 2.0, %v1175
        %v1208 = vsub.f32 2.0, %v1176
        %v1209 = vsub.f32 2.0, %v1177
        %v1210 = vsub.f32 2.0, %v1178
        %v1211 = vsub.f32 2.0, %v1179
        %v1212 = vsub.f32 2.0, %v1180
        %v1213 = vsub.f32 2.0, %v1181
        %v1214 = vsub.f32 2.0, %v1182
        %v1215 = vsub.f32 2.0, %v1183
        %v1216 = vsub.f32 2.0, %v1184
        %v1217 = vsub.f32 2.0, %v1185
        %v1218 = vsub.f32 2.0, %v1186
        %v1219 = vmul.f32 %v1123, %v1187
        %v1220 = vmul.f32 %v1124, %v1188
        %v1221 = vmul.f32 %v1125, %v1189
        %v1222 = vmul.f32 %v1126, %v1190
        %v1223 = vmul.f32 %v1127, %v1191
        %v1224 = vmul.f32 %v1128, %v1192
        %v1225 = vmul.f32 %v1129, %v1193
        %v1226 = vmul.f32 %v1130, %v1194
        %v1227 = vmul.f32 %v1131, %v1195
        %v1228 = vmul.f32 %v1132, %v1196
        %v1229 = vmul.f32 %v1133, %v1197
        %v1230 = vmul.f32 %v1134, %v1198
        %v1231 = vmul.f32 %v1135, %v1199
        %v1232 = vmul.f32 %v1136, %v1200
        %v1233 = vmul.f32 %v1137, %v1201
        %v1234 = vmul.f32 %v1138, %v1202
        %v1235 = vmul.f32 %v1139, %v1203
        %v1236 = vmul.f32 %v1140, %v1204
        %v1237 = vmul.f32 %v1141, %v1205
        %v1238 = vmul.f32 %v1142, %v1206
        %v1239 = vmul.f32 %v1143, %v1207
        %v1240 = vmul.f32 %v1144, %v1208
        %v1241 = vmul.f32 %v1145, %v1209
        %v1242 = vmul.f32 %v1146, %v1210
        %v1243 = vmul.f32 %v1147, %v1211
        %v1244 = vmul.f32 %v1148, %v1212
        %v1245 = vmul.f32 %v1149, %v1213
        %v1246 = vmul.f32 %v1150, %v1214
        %v1247 = vmul.f32 %v1151, %v1215
        %v1248 = vmul.f32 %v1152, %v1216
        %v1249 = vmul.f32 %v1153, %v1217
        %v1250 = vmul.f32 %v1154, %v1218
        %v1251 = vmul.f32 %v900, %v1219
        %v1252 = vmul.f32 %v902, %v1219
        %v1253 = vmul.f32 %v904, %v1220
        %v1254 = vmul.f32 %v906, %v1220
        %v1255 = vmul.f32 %v908, %v1221
        %v1256 = vmul.f32 %v910, %v1221
        %v1257 = vmul.f32 %v912, %v1222
        %v1258 = vmul.f32 %v914, %v1222
        %v1259 = vmul.f32 %v916, %v1223
        %v1260 = vmul.f32 %v918, %v1223
        %v1261 = vmul.f32 %v920, %v1224
        %v1262 = vmul.f32 %v922, %v1224
        %v1263 = vmul.f32 %v924, %v1225
        %v1264 = vmul.f32 %v926, %v1225
        %v1265 = vmul.f32 %v928, %v1226
        %v1266 = vmul.f32 %v930, %v1226
        %v1267 = vmul.f32 %v932, %v1227
        %v1268 = vmul.f32 %v934, %v1227
        %v1269 = vmul.f32 %v936, %v1228
        %v1270 = vmul.f32 %v938, %v1228
        %v1271 = vmul.f32 %v940, %v1229
        %v1272 = vmul.f32 %v942, %v1229
        %v1273 = vmul.f32 %v944, %v1230
        %v1274 = vmul.f32 %v946, %v1230
        %v1275 = vmul.f32 %v948, %v1231
        %v1276 = vmul.f32 %v950, %v1231
        %v1277 = vmul.f32 %v952, %v1232
        %v1278 = vmul.f32 %v954, %v1232
        %v1279 = vmul.f32 %v956, %v1233
        %v1280 = vmul.f32 %v958, %v1233
        %v1281 = vmul.f32 %v960, %v1234
        %v1282 = vmul.f32 %v962, %v1234
        %v1283 = vmul.f32 %v964, %v1235
        %v1284 = vmul.f32 %v966, %v1235
        %v1285 = vmul.f32 %v968, %v1236
        %v1286 = vmul.f32 %v970, %v1236
        %v1287 = vmul.f32 %v972, %v1237
        %v1288 = vmul.f32 %v974, %v1237
        %v1289 = vmul.f32 %v976, %v1238
        %v1290 = vmul.f32 %v978, %v1238
        %v1291 = vmul.f32 %v980, %v1239
        %v1292 = vmul.f32 %v982, %v1239
        %v1293 = vmul.f32 %v984, %v1240
        %v1294 = vmul.f32 %v986, %v1240
        %v1295 = vmul.f32 %v988, %v1241
        %v1296 = vmul.f32 %v990, %v1241
        %v1297 = vmul.f32 %v992, %v1242
        %v1298 = vmul.f32 %v994, %v1242
        %v1299 = vmul.f32 %v996, %v1243
        %v1300 = vmul.f32 %v998, %v1243
        %v1301 = vmul.f32 %v1000, %v1244
        %v1302 = vmul.f32 %v1002, %v1244
        %v1303 = vmul.f32 %v1004, %v1245
        %v1304 = vmul.f32 %v1006, %v1245
        %v1305 = vmul.f32 %v1008, %v1246
        %v1306 = vmul.f32 %v1010, %v1246
        %v1307 = vmul.f32 %v1012, %v1247
        %v1308 = vmul.f32 %v1014, %v1247
        %v1309 = vmul.f32 %v1016, %v1248
        %v1310 = vmul.f32 %v1018, %v1248
        %v1311 = vmul.f32 %v1020, %v1249
        %v1312 = vmul.f32 %v1022, %v1249
        %v1313 = vmul.f32 %v1024, %v1250
        %v1314 = vmul.f32 %v1026, %v1250
        %v1315 = vld [vmem:[%s236] sm:$0xff]
        %v1316 = vld [vmem:[%s236 + $0x8] sm:$0xff]
        %1317 = vmatpush.msra.mxu0 %v1281
        %1318 = vmatpush.msra.mxu0 %v1279
        %1319 = vmatpush.msra.mxu0 %v1277
        %1320 = vmatpush.msra.mxu0 %v1275
        %1321 = vmatpush.msra.mxu0 %v1273
        %1322 = vmatpush.msra.mxu0 %v1271
        %1323 = vmatpush.msra.mxu0 %v1269
        %1324 = vmatpush.msra.mxu0 %v1267
        %1325 = vmatpush.msra.mxu0 %v1265
        %1326 = vmatpush.msra.mxu0 %v1263
        %1327 = vmatpush.msra.mxu0 %v1261
        %1328 = vmatpush.msra.mxu0 %v1259
        %1329 = vmatpush.msra.mxu0 %v1257
        %1330 = vmatpush.msra.mxu0 %v1255
        %1331 = vmatpush.msra.mxu0 %v1253
        %1332 = vmatpush.msra.mxu0 %v1251
        %1333 = vmatmul.f32.gmra.mxu0 %v326
        %v1334 = vpop.f32.mrf.mxu0
        %v1335 = vadd.f32 0.0, %v1334
        %1336 = vdwg.mxu0
        %1337 = vmatpush.msra.mxu0 %v1313
        %1338 = vmatpush.msra.mxu0 %v1311
        %1339 = vmatpush.msra.mxu0 %v1309
        %1340 = vmatpush.msra.mxu0 %v1307
        %1341 = vmatpush.msra.mxu0 %v1305
        %1342 = vmatpush.msra.mxu0 %v1303
        %1343 = vmatpush.msra.mxu0 %v1301
        %1344 = vmatpush.msra.mxu0 %v1299
        %1345 = vmatpush.msra.mxu0 %v1297
        %1346 = vmatpush.msra.mxu0 %v1295
        %1347 = vmatpush.msra.mxu0 %v1293
        %1348 = vmatpush.msra.mxu0 %v1291
        %1349 = vmatpush.msra.mxu0 %v1289
        %1350 = vmatpush.msra.mxu0 %v1287
        %1351 = vmatpush.msra.mxu0 %v1285
        %1352 = vmatpush.msra.mxu0 %v1283
        %1353 = vmatmul.f32.gmra.mxu0 %v349
        %v1354 = vpop.f32.mrf.mxu0
        %v1355 = vadd.f32 %v1335, %v1354
        %1356 = vdwg.mxu0
        %1357 = vmatpush.msra.mxu0 %v1282
        %1358 = vmatpush.msra.mxu0 %v1280
        %1359 = vmatpush.msra.mxu0 %v1278
        %1360 = vmatpush.msra.mxu0 %v1276
        %1361 = vmatpush.msra.mxu0 %v1274
        %1362 = vmatpush.msra.mxu0 %v1272
        %1363 = vmatpush.msra.mxu0 %v1270
        %1364 = vmatpush.msra.mxu0 %v1268
        %1365 = vmatpush.msra.mxu0 %v1266
        %1366 = vmatpush.msra.mxu0 %v1264
        %1367 = vmatpush.msra.mxu0 %v1262
        %1368 = vmatpush.msra.mxu0 %v1260
        %1369 = vmatpush.msra.mxu0 %v1258
        %1370 = vmatpush.msra.mxu0 %v1256
        %1371 = vmatpush.msra.mxu0 %v1254
        %1372 = vmatpush.msra.mxu0 %v1252
        %1373 = vmatmul.f32.gmra.mxu0 %v326
        %v1374 = vpop.f32.mrf.mxu0
        %v1375 = vadd.f32 0.0, %v1374
        %1376 = vdwg.mxu0
        %1377 = vmatpush.msra.mxu0 %v1314
        %1378 = vmatpush.msra.mxu0 %v1312
        %1379 = vmatpush.msra.mxu0 %v1310
        %1380 = vmatpush.msra.mxu0 %v1308
        %1381 = vmatpush.msra.mxu0 %v1306
        %1382 = vmatpush.msra.mxu0 %v1304
        %1383 = vmatpush.msra.mxu0 %v1302
        %1384 = vmatpush.msra.mxu0 %v1300
        %1385 = vmatpush.msra.mxu0 %v1298
        %1386 = vmatpush.msra.mxu0 %v1296
        %1387 = vmatpush.msra.mxu0 %v1294
        %1388 = vmatpush.msra.mxu0 %v1292
        %1389 = vmatpush.msra.mxu0 %v1290
        %1390 = vmatpush.msra.mxu0 %v1288
        %1391 = vmatpush.msra.mxu0 %v1286
        %1392 = vmatpush.msra.mxu0 %v1284
        %1393 = vmatmul.f32.gmra.mxu0 %v349
        %v1394 = vpop.f32.mrf.mxu0
        %v1395 = vadd.f32 %v1375, %v1394
        %1396 = vdwg.mxu0
        %v1397 = vadd.f32 %v1315, %v1355
        %v1398 = vadd.f32 %v1316, %v1395
        %1399 = vst [vmem:[%s236] sm:$0xff] %v1397
        %1400 = vst [vmem:[%s236 + $0x8] sm:$0xff] %v1398
        %s1401 = sand.u32 %s139, 1
        %s1402 = scalar_lea.sflag [#allocation5], %s1401
        %s1403 = sand.u32 %s139, 1
        %s1404 = smul.addr %s1403, 16
        %s1405 = scalar_lea.vmem [#allocation6], %s1404
        // Predicated region
        $region45: #{tpu_custom_call.1} parent=35 // pred_check
          %p1406 = pneg %p149
        $region46: #{tpu_custom_call.1} parent=35 // pred_check_branch
          %1408 = sbr.rel (%p1406) target = $region48
        $region47: #{tpu_custom_call.1} parent=35 // pred_region
          %1410 = vsyncadd %s1402, 0
          %s1411 = smul.addr %s27, 2
          %s1412 = smul.addr %s26, 4
          %s1413 = sadd.s32 %s1411, %s1412
          %s1414 = smul.addr %s1413, 8
          %s1415 = scalar_lea.hbm %s4, %s1414
          %s1417 = sshll.u32 %s1405, 4
          %s1418 = int_to_ptr.vmem [resolvable:$true] %s1417
          %s1419 = sshll.u32 %s1415, 4
          %s1420 = int_to_ptr.hbm [resolvable:$true] %s1419
          %1422 = dma.vmem_to_hbm [thread:$0]  %s1418, 256, %s1420, %s1402
        $region48: #{tpu_custom_call.1} parent=35 // pred_fallthru
          _
      $region36: #{tpu_custom_call.1} parent=5 // pred_fallthru
        _
      %p1423 = scmp.le.s32.totalorder 2, %s16
      // Predicated region
      $region49: #{tpu_custom_call.1} parent=5 // pred_check
        %p1424 = pneg %p1423
      $region50: #{tpu_custom_call.1} parent=5 // pred_check_branch
        %1426 = sbr.rel (%p1424) target = $region52
      $region51: #{tpu_custom_call.1} parent=5 // pred_region
        %s1427 = ssub.s32 %s16, 2
        // Predicated region
        $region53: #{tpu_custom_call.1} parent=51 // pred_check
          %p1428 = pneg %p155
        $region54: #{tpu_custom_call.1} parent=51 // pred_check_branch
          %1430 = sbr.rel (%p1428) target = $region56
        $region55: #{tpu_custom_call.1} parent=51 // pred_region
          %s1431 = sand.u32 %s140, 1
          %s1432 = scalar_lea.sflag [#allocation5], %s1431
          %s1433 = sand.u32 %s140, 1
          %s1434 = smul.addr %s1433, 16
          %s1435 = scalar_lea.vmem [#allocation6], %s1434
          %1437 = dma.done %s1432, 256
        $region56: #{tpu_custom_call.1} parent=51 // pred_fallthru
          _
      $region52: #{tpu_custom_call.1} parent=5 // pred_fallthru
        _
    $region6: #{tpu_custom_call.1} parent=1 // loop_footer
      %s20 = sadd.s32 1, %s16
    $region7: #{tpu_custom_call.1} parent=1 // loop_footer_branch
      %15 = sbr.rel target = $region3
    $region8: #{tpu_custom_call.1} parent=1 // loop_exit
      _
    %1438 = vsyncpa [#allocation4], 1
    %s1439 = scalar_lea.sflag [#allocation4], 1
    %1440 = vsyncpa %s1439, 1
    %1441 = vsyncpa [#allocation5], 1
    %s1442 = scalar_lea.sflag [#allocation5], 1
    %1443 = vsyncpa %s1442, 1

</llo_original>
